<compile_context>
chip_gen: v7x
topology: tpu7x:2x2x1
jax: 0.10.0
libtpu: 0.0.40
codegen_flags: <defaults>
</compile_context>

<pallas_src>
import jax
import jax.numpy as jnp
from jax import lax
from jax.experimental import pallas as pl
from jax.experimental.pallas import tpu as pltpu

EPS = 1e-12
BN_EPS = 1e-5
LANE = 128      # TPU lane width
NUM_Z = 3       # logical width of the softmax / "part" dimension
ZPAD = 8        # sublane-friendly padding of the 3-wide dimension
NEG_INF = -1e30


def _round_up(v, m):
    return (v + m - 1) // m * m


def _pad2(a, rows, cols, value=0.0):
    return jnp.pad(a, ((0, rows - a.shape[0]), (0, cols - a.shape[1])),
                   constant_values=value)


def _pad_last(a, target):
    pad = target - a.shape[-1]
    if pad == 0:
        return a
    return jnp.pad(a, [(0, 0)] * (a.ndim - 1) + [(0, pad)])


def srfc_kernel(x_ref, z2_ref,
                w1_ref, b1_ref,
                wc_ref, bc_ref, sc_ref, tc_ref,
                w3_ref, b3_ref, s3_ref, t3_ref,
                y_ref, d_ref):
    bt, n, cp = x_ref.shape
    npad = d_ref.shape[-1]

    x_nat = x_ref[...]                      # native dtype (bf16 stays bf16)
    xf = x_nat.astype(jnp.float32)
    x_bf = x_nat.astype(jnp.bfloat16)
    z2 = z2_ref[...].astype(jnp.float32)    # (bt, n, ZPAD), padded lanes exactly 0

    # ---- z1 = softmax(conv1(x)); mask is baked into b1's padded lanes (-1e30)
    x_rows = xf.reshape(bt * n, cp)
    logits = (jnp.dot(x_rows, w1_ref[...], preferred_element_type=jnp.float32)
              + b1_ref[...]).reshape(bt, n, ZPAD)
    m = jnp.max(logits, axis=-1, keepdims=True)
    e = jnp.exp(logits - m)                 # padded lanes underflow to exactly 0
    z1 = e * pl.reciprocal(jnp.sum(e, axis=-1, keepdims=True), approx=True)

    # ---- cosine-similarity grams, written directly into d_ref bands ---------
    def inv_norm(v32):                       # 1 / max(||v||, eps)   (EUP rsqrt)
        ss = jnp.sum(v32 * v32, axis=-1, keepdims=True)
        return lax.rsqrt(jnp.maximum(ss, EPS * EPS))

    def gram(v):                             # batched v @ v^T, f32 accumulation
        return lax.dot_general(v, v, (((2,), (2,)), ((0,), (0,))),
                               preferred_element_type=jnp.float32)

    if npad > n:                             # zero the lane padding once
        d_ref[:, :, n:] = jnp.zeros((bt, 3 * n, npad - n), d_ref.dtype)

    inv_x = inv_norm(xf)                                          # (bt, n, 1)
    g_x = gram(x_nat) * inv_x * jnp.swapaxes(inv_x, 1, 2)          # rescale (n,n)
    inv_z1 = inv_norm(z1)
    g_z1 = gram(z1) * inv_z1 * jnp.swapaxes(inv_z1, 1, 2)
    inv_z2 = inv_norm(z2)
    g_z2 = gram(z2) * inv_z2 * jnp.swapaxes(inv_z2, 1, 2)

    d_ref[:, 0:n, 0:n] = g_z1.astype(d_ref.dtype)
    d_ref[:, n:2 * n, 0:n] = g_x.astype(d_ref.dtype)
    d_ref[:, 2 * n:3 * n, 0:n] = g_z2.astype(d_ref.dtype)

    # ---- encode / decode matrices (EUP reciprocals) --------------------------
    z = z1 + z2
    enc = z * pl.reciprocal(jnp.sum(z, axis=1, keepdims=True) + EPS, approx=True)
    dec = z * pl.reciprocal(jnp.sum(z, axis=2, keepdims=True) + EPS, approx=True)

    # ---- u = enc^T @ x (per batch), then 1x1 conv + BN + ReLU on merged rows -
    enc_t = jnp.swapaxes(enc, 1, 2).astype(jnp.bfloat16)           # (bt, ZPAD, n)
    u = lax.dot_general(enc_t, x_bf, (((2,), (1,)), ((0,), (0,))),
                        preferred_element_type=jnp.float32)        # (bt, ZPAD, cp)
    u_rows = u.reshape(bt * ZPAD, cp)
    u_rows = jnp.dot(u_rows.astype(jnp.bfloat16), wc_ref[...],
                     preferred_element_type=jnp.float32) + bc_ref[...]
    u_rows = jnp.maximum(u_rows * sc_ref[...] + tc_ref[...], 0.0)
    u = u_rows.reshape(bt, ZPAD, cp)

    # ---- y = dec @ u (per batch), conv3 on merged rows, residual add ---------
    y = lax.dot_general(dec.astype(jnp.bfloat16), u.astype(jnp.bfloat16),
                        (((2,), (1,)), ((0,), (0,))),
                        preferred_element_type=jnp.float32)        # (bt, n, cp)
    y_rows = y.reshape(bt * n, cp)
    y_rows = jnp.dot(y_rows.astype(jnp.bfloat16), w3_ref[...],
                     preferred_element_type=jnp.float32) + b3_ref[...]
    y_rows = jnp.maximum(y_rows * s3_ref[...] + t3_ref[...], 0.0)
    y_ref[...] = (y_rows.reshape(bt, n, cp) + xf).astype(y_ref.dtype)


def _pick_block_batch(bs, n, row_target=256):
    """Largest divisor of bs with bt*n <= row_target (fills the MXU's M dim)."""
    best = 1
    for d in range(1, bs + 1):
        if bs % d == 0 and d * n <= row_target:
            best = d
    return best


def _vmem_limit_bytes():
    cap = 128 * 1024 * 1024
    try:
        info = pltpu.get_tpu_info()
        cap = int(getattr(info, "vmem_capacity_bytes", cap) or cap)
    except Exception:
        pass
    # ~100 MiB on 128-MiB parts (v5e/v6e), ~54 MiB on 64-MiB v7x.
    return min(100 * 1024 * 1024, int(cap * 0.85))


def srfc_forward(x, part_coordinate, params):
    """jit-friendly forward: returns (y, [[d_z1, d_x], [d_z2, d_coord]])."""
    bs, n, c = x.shape
    cp = _round_up(c, LANE)
    npad = _round_up(n, LANE)
    bt = _pick_block_batch(bs, n)
    out_dtype = x.dtype
    p = params

    # Ship x at its original dtype (halves HBM->VMEM bytes for bf16 models).
    x_p = _pad_last(x, cp)
    pcf = part_coordinate.astype(jnp.float32)

    # conv2 branch (coordinates -> z2) hoisted to XLA (K dim is only 4).
    h = jnp.einsum("bnk,kc->bnc", pcf, p["w2a"]) + p["b2a"]
    h = jnp.maximum(h * p["s2"] + p["t2"], 0.0)
    logits2 = jnp.einsum("bnc,ck->bnk", h, p["w2b"]) + p["b2b"]
    z2 = jax.nn.softmax(logits2, axis=-1)
    z2_p = _pad_last(z2, ZPAD).astype(jnp.float32)

    # Softmax mask baked into conv1's padded bias lanes.
    w_args = [
        _pad2(p["w1"].astype(jnp.float32), cp, ZPAD),
        _pad2(p["b1"].astype(jnp.float32), 1, ZPAD, value=NEG_INF),
        _pad2(p["wc"], cp, cp).astype(jnp.bfloat16),
        _pad2(p["bc"].astype(jnp.float32), 1, cp),
        _pad2(p["sc"].astype(jnp.float32), 1, cp),
        _pad2(p["tc"].astype(jnp.float32), 1, cp),
        _pad2(p["w3"], cp, cp).astype(jnp.bfloat16),
        _pad2(p["b3"].astype(jnp.float32), 1, cp),
        _pad2(p["s3"].astype(jnp.float32), 1, cp),
        _pad2(p["t3"].astype(jnp.float32), 1, cp),
    ]

    def batch_spec(rows, lanes):
        return pl.BlockSpec((bt, rows, lanes), lambda g: (g, 0, 0))

    def weight_spec(arr):
        nd = arr.ndim
        return pl.BlockSpec(arr.shape, lambda g, _nd=nd: (0,) * _nd)

    y_p, slab = pl.pallas_call(
        srfc_kernel,
        grid=(bs // bt,),
        in_specs=[batch_spec(n, cp), batch_spec(n, ZPAD)]
                 + [weight_spec(w) for w in w_args],
        out_specs=(batch_spec(n, cp), batch_spec(3 * n, npad)),
        out_shape=(jax.ShapeDtypeStruct((bs, n, cp), out_dtype),
                   jax.ShapeDtypeStruct((bs, 3 * n, npad), out_dtype)),
        compiler_params=pltpu.CompilerParams(
            dimension_semantics=("parallel",),
            vmem_limit_bytes=_vmem_limit_bytes()),
    )(x_p, z2_p, *w_args)

    y = y_p[:, :, :c]
    d_z1 = slab[:, 0:n, :n]
    d_x = slab[:, n:2 * n, :n]
    d_z2 = slab[:, 2 * n:3 * n, :n]

    # Coordinate distance depends only on part_coordinate -> plain XLA.
    yc = pcf[:, :, 0] + jnp.floor(pcf[:, :, 2] / 2.0)
    xc = pcf[:, :, 1] + jnp.floor(pcf[:, :, 3] / 2.0)
    dy = (yc[:, :, None] - yc[:, None, :]) ** 2
    dx = (xc[:, :, None] - xc[:, None, :]) ** 2
    d_c = (1.0 - 2.0 * jnp.sqrt(dx + dy)).astype(out_dtype)

    # Matches PyTorch: (y, [[z1-gram, x-gram], [z2-gram, coordinate-distance]])
    return y, [[d_z1, d_x], [d_z2, d_c]]


def srfc_reference(x, part_coordinate, p):
    """Pure-XLA f32 reference mirroring the PyTorch module (eval-mode BN)."""
    xf = x.astype(jnp.float32)
    pcf = part_coordinate.astype(jnp.float32)

    def normalize(v):
        nrm = jnp.sqrt(jnp.sum(v * v, axis=-1, keepdims=True))
        return v / jnp.maximum(nrm, EPS)

    def gram(v):
        vn = normalize(v)
        return jnp.einsum("bic,bjc->bij", vn, vn)

    z1 = jax.nn.softmax(jnp.einsum("bnc,ck->bnk", xf, p["w1"]) + p["b1"], axis=-1)
    h = jnp.maximum((jnp.einsum("bnk,kc->bnc", pcf, p["w2a"]) + p["b2a"]) * p["s2"]
                    + p["t2"], 0.0)
    z2 = jax.nn.softmax(jnp.einsum("bnc,ck->bnk", h, p["w2b"]) + p["b2b"], axis=-1)

    yc = pcf[:, :, 0] + jnp.floor(pcf[:, :, 2] / 2.0)
    xc = pcf[:, :, 1] + jnp.floor(pcf[:, :, 3] / 2.0)
    d_c = 1.0 - 2.0 * jnp.sqrt((yc[:, :, None] - yc[:, None, :]) ** 2
                               + (xc[:, :, None] - xc[:, None, :]) ** 2)

    z = z1 + z2
    enc = z / (jnp.sum(z, axis=1, keepdims=True) + EPS)
    dec = z / (jnp.sum(z, axis=2, keepdims=True) + EPS)
    u = jnp.einsum("bne,bnc->bec", enc, xf)
    u = jnp.maximum((jnp.einsum("bec,cd->bed", u, p["wc"]) + p["bc"]) * p["sc"]
                    + p["tc"], 0.0)
    y = jnp.einsum("bne,bec->bnc", dec, u)
    y = jnp.maximum((jnp.einsum("bnc,cd->bnd", y, p["w3"]) + p["b3"]) * p["s3"]
                    + p["t3"], 0.0)
    y = y + xf
    return y, [[gram(z1), gram(xf)], [gram(z2), d_c]]


def init_params(c, key):
    ks = jax.random.split(key, 16)

    def w(k, shape, scale=0.3):
        return scale * jax.random.normal(k, shape, jnp.float32)

    def bn(kg, kb):
        # eval-mode BN: running_mean=0, running_var=1 (fresh PyTorch BN defaults)
        gamma = 1.0 + 0.1 * jax.random.normal(kg, (1, c), jnp.float32)
        beta = 0.1 * jax.random.normal(kb, (1, c), jnp.float32)
        scale = gamma / jnp.sqrt(1.0 + BN_EPS)
        shift = beta
        return scale, shift

    s2, t2 = bn(ks[4], ks[5])
    sc, tc = bn(ks[10], ks[11])
    s3, t3 = bn(ks[14], ks[15])
    return {
        # conv1: Conv2d(c, 3, 1)
        "w1": w(ks[0], (c, 3)), "b1": w(ks[1], (1, 3), 0.1),
        # conv2: Conv2d(4, c, 1) + BN + ReLU + Conv2d(c, 3, 1)
        "w2a": w(ks[2], (4, c)), "b2a": w(ks[3], (1, c), 0.1),
        "s2": s2, "t2": t2,
        "w2b": w(ks[6], (c, 3)), "b2b": w(ks[7], (1, 3), 0.1),
        # conv: Conv2d(c, c, 1) + BN + ReLU
        "wc": w(ks[8], (c, c)), "bc": w(ks[9], (1, c), 0.1),
        "sc": sc, "tc": tc,
        # conv3: Conv2d(c, c, 1) + BN + ReLU
        "w3": w(ks[12], (c, c)), "b3": w(ks[13], (1, c), 0.1),
        "s3": s3, "t3": t3,
    }


if __name__ == "__main__":
    key = jax.random.PRNGKey(0)
    k_x, k_pc, k_p = jax.random.split(key, 3)
    bs, n, c = 2, 8, 4
    x = jax.random.normal(k_x, (bs, n, c), jnp.float32)
    # box-like coordinates (y, x, h, w)
    part_coordinate = jnp.floor(
        jax.random.uniform(k_pc, (bs, n, 4), jnp.float32, 0.0, 16.0))
    params = init_params(c, k_p)

    fwd = jax.jit(srfc_forward)
    y, dists = fwd(x, part_coordinate, params)
    jax.block_until_ready((y, dists))

    assert y.shape == (bs, n, c)
    assert all(d.shape == (bs, n, n) for pair in dists for d in pair)
    assert bool(jnp.all(jnp.isfinite(y)))
    assert all(bool(jnp.all(jnp.isfinite(d))) for pair in dists for d in pair)

    # Loose-tolerance check against a pure-XLA reference (bf16 MXU operands and
    # approximate EUP reciprocals introduce small deviations by design).
    y_ref, dists_ref = srfc_reference(x, part_coordinate, params)

    def max_err(a, b):
        return float(jnp.max(jnp.abs(a.astype(jnp.float32) - b.astype(jnp.float32))))

    assert max_err(y, y_ref) < 1e-1
    for pair, pair_ref in zip(dists, dists_ref):
        for d_k, d_r in zip(pair, pair_ref):
            assert max_err(d_k, d_r) < 2e-2

    print("KERNEL_OK")
</pallas_src>

<mosaic_0001>
module attributes {stable_mosaic.version = 11 : i64} {
  func.func @srfc_kernel(%arg0: i32, %arg1: memref<2x8x128xf32, #tpu.memory_space<vmem>>, %arg2: memref<2x8x8xf32, #tpu.memory_space<vmem>>, %arg3: memref<128x8xf32, #tpu.memory_space<vmem>>, %arg4: memref<1x8xf32, #tpu.memory_space<vmem>>, %arg5: memref<128x128xbf16, #tpu.memory_space<vmem>>, %arg6: memref<1x128xf32, #tpu.memory_space<vmem>>, %arg7: memref<1x128xf32, #tpu.memory_space<vmem>>, %arg8: memref<1x128xf32, #tpu.memory_space<vmem>>, %arg9: memref<128x128xbf16, #tpu.memory_space<vmem>>, %arg10: memref<1x128xf32, #tpu.memory_space<vmem>>, %arg11: memref<1x128xf32, #tpu.memory_space<vmem>>, %arg12: memref<1x128xf32, #tpu.memory_space<vmem>>, %arg13: memref<2x8x128xf32, #tpu.memory_space<vmem>>, %arg14: memref<2x24x128xf32, #tpu.memory_space<vmem>>) attributes {dimension_semantics = [#tpu.dimension_semantics<parallel>], iteration_bounds = array<i64: 1>, scalar_prefetch = 0 : i64, scratch_operands = 0 : i64, tpu.core_type = #tpu.core_type<tc>, window_params = [{transform_indices = @transform_0, window_bounds = array<i64: 2, 8, 128>}, {transform_indices = @transform_1, window_bounds = array<i64: 2, 8, 8>}, {pipeline_mode = #tpu.pipeline_mode<synchronous>, transform_indices = @transform_2, window_bounds = array<i64: 128, 8>}, {pipeline_mode = #tpu.pipeline_mode<synchronous>, transform_indices = @transform_3, window_bounds = array<i64: 1, 8>}, {pipeline_mode = #tpu.pipeline_mode<synchronous>, transform_indices = @transform_4, window_bounds = array<i64: 128, 128>}, {pipeline_mode = #tpu.pipeline_mode<synchronous>, transform_indices = @transform_5, window_bounds = array<i64: 1, 128>}, {pipeline_mode = #tpu.pipeline_mode<synchronous>, transform_indices = @transform_6, window_bounds = array<i64: 1, 128>}, {pipeline_mode = #tpu.pipeline_mode<synchronous>, transform_indices = @transform_7, window_bounds = array<i64: 1, 128>}, {pipeline_mode = #tpu.pipeline_mode<synchronous>, transform_indices = @transform_8, window_bounds = array<i64: 128, 128>}, {pipeline_mode = #tpu.pipeline_mode<synchronous>, transform_indices = @transform_9, window_bounds = array<i64: 1, 128>}, {pipeline_mode = #tpu.pipeline_mode<synchronous>, transform_indices = @transform_10, window_bounds = array<i64: 1, 128>}, {pipeline_mode = #tpu.pipeline_mode<synchronous>, transform_indices = @transform_11, window_bounds = array<i64: 1, 128>}, {transform_indices = @transform_12, window_bounds = array<i64: 2, 8, 128>}, {transform_indices = @transform_13, window_bounds = array<i64: 2, 24, 128>}]} {
    %c0 = arith.constant 0 : index
    %c0_0 = arith.constant 0 : index
    %c0_1 = arith.constant 0 : index
    %0 = vector.load %arg1[%c0, %c0_0, %c0_1] : memref<2x8x128xf32, #tpu.memory_space<vmem>>, vector<2x8x128xf32>
    %1 = arith.truncf %0 : vector<2x8x128xf32> to vector<2x8x128xbf16>
    %c0_2 = arith.constant 0 : index
    %c0_3 = arith.constant 0 : index
    %c0_4 = arith.constant 0 : index
    %2 = vector.load %arg2[%c0_2, %c0_3, %c0_4] : memref<2x8x8xf32, #tpu.memory_space<vmem>>, vector<2x8x8xf32>
    %3 = vector.shape_cast %0 : vector<2x8x128xf32> to vector<16x128xf32>
    %c0_5 = arith.constant 0 : index
    %c0_6 = arith.constant 0 : index
    %4 = vector.load %arg3[%c0_5, %c0_6] : memref<128x8xf32, #tpu.memory_space<vmem>>, vector<128x8xf32>
    %cst = arith.constant dense<0.000000e+00> : vector<16x8xf32>
    %5 = tpu.matmul %3, %4, %cst {dimension_numbers = #tpu.dot_dimension_numbers<[1], [0], [0], [1], [0, 0, 1, 1], [], []>} : vector<16x128xf32>, vector<128x8xf32>, vector<16x8xf32> -> vector<16x8xf32>
    %c0_7 = arith.constant 0 : index
    %c0_8 = arith.constant 0 : index
    %6 = vector.load %arg4[%c0_7, %c0_8] : memref<1x8xf32, #tpu.memory_space<vmem>>, vector<1x8xf32>
    %7 = vector.broadcast %6 : vector<1x8xf32> to vector<16x8xf32>
    %8 = arith.addf %5, %7 : vector<16x8xf32>
    %9 = vector.shape_cast %8 : vector<16x8xf32> to vector<2x8x8xf32>
    %cst_9 = arith.constant dense<0xFF800000> : vector<2x8xf32>
    %10 = vector.multi_reduction <maximumf>, %9, %cst_9 [2] : vector<2x8x8xf32> to vector<2x8xf32>
    %11 = vector.shape_cast %10 : vector<2x8xf32> to vector<2x8x1xf32>
    %12 = vector.broadcast %11 : vector<2x8x1xf32> to vector<2x8x8xf32>
    %13 = arith.subf %9, %12 : vector<2x8x8xf32>
    %14 = math.exp %13 : vector<2x8x8xf32>
    %cst_10 = arith.constant dense<0.000000e+00> : vector<2x8xf32>
    %15 = vector.multi_reduction <add>, %14, %cst_10 [2] : vector<2x8x8xf32> to vector<2x8xf32>
    %16 = vector.shape_cast %15 : vector<2x8xf32> to vector<2x8x1xf32>
    %17 = tpu.reciprocal %16 {approx = true} : vector<2x8x1xf32> -> vector<2x8x1xf32>
    %18 = vector.broadcast %17 : vector<2x8x1xf32> to vector<2x8x8xf32>
    %19 = arith.mulf %14, %18 : vector<2x8x8xf32>
    %cst_11 = arith.constant 0.000000e+00 : f32
    %20 = vector.broadcast %cst_11 : f32 to vector<2x24x120xf32>
    %c0_12 = arith.constant 0 : index
    %c0_13 = arith.constant 0 : index
    %c8 = arith.constant 8 : index
    %21 = vector.load %arg14[%c0_12, %c0_13, %c8] : memref<2x24x128xf32, #tpu.memory_space<vmem>>, vector<2x24x120xf32>
    tpu.vector_store %arg14[%c0_12, %c0_13, %c8], %20 {strides = array<i32>} : memref<2x24x128xf32, #tpu.memory_space<vmem>>, vector<2x24x120xf32>,
    %22 = arith.mulf %0, %0 : vector<2x8x128xf32>
    %cst_14 = arith.constant dense<0.000000e+00> : vector<2x8xf32>
    %23 = vector.multi_reduction <add>, %22, %cst_14 [2] : vector<2x8x128xf32> to vector<2x8xf32>
    %24 = vector.shape_cast %23 : vector<2x8xf32> to vector<2x8x1xf32>
    %cst_15 = arith.constant 1.000000e-24 : f32
    %25 = vector.broadcast %cst_15 : f32 to vector<2x8x1xf32>
    %26 = arith.maximumf %24, %25 : vector<2x8x1xf32>
    %27 = math.rsqrt %26 : vector<2x8x1xf32>
    %cst_16 = arith.constant dense<0.000000e+00> : vector<2x8x8xf32>
    %28 = tpu.matmul %0, %0, %cst_16 {dimension_numbers = #tpu.dot_dimension_numbers<[2], [2], [1], [1], [0, 0, 0, 1, 1, 1], [0], [0]>} : vector<2x8x128xf32>, vector<2x8x128xf32>, vector<2x8x8xf32> -> vector<2x8x8xf32>
    %29 = vector.broadcast %27 : vector<2x8x1xf32> to vector<2x8x8xf32>
    %30 = arith.mulf %28, %29 : vector<2x8x8xf32>
    %31 = tpu.transpose %27, [0, 2, 1] : vector<2x8x1xf32> -> vector<2x1x8xf32>
    %32 = vector.broadcast %31 : vector<2x1x8xf32> to vector<2x8x8xf32>
    %33 = arith.mulf %30, %32 : vector<2x8x8xf32>
    %34 = arith.mulf %19, %19 : vector<2x8x8xf32>
    %cst_17 = arith.constant dense<0.000000e+00> : vector<2x8xf32>
    %35 = vector.multi_reduction <add>, %34, %cst_17 [2] : vector<2x8x8xf32> to vector<2x8xf32>
    %36 = vector.shape_cast %35 : vector<2x8xf32> to vector<2x8x1xf32>
    %cst_18 = arith.constant 1.000000e-24 : f32
    %37 = vector.broadcast %cst_18 : f32 to vector<2x8x1xf32>
    %38 = arith.maximumf %36, %37 : vector<2x8x1xf32>
    %39 = math.rsqrt %38 : vector<2x8x1xf32>
    %cst_19 = arith.constant dense<0.000000e+00> : vector<2x8x8xf32>
    %40 = tpu.matmul %19, %19, %cst_19 {dimension_numbers = #tpu.dot_dimension_numbers<[2], [2], [1], [1], [0, 0, 0, 1, 1, 1], [0], [0]>} : vector<2x8x8xf32>, vector<2x8x8xf32>, vector<2x8x8xf32> -> vector<2x8x8xf32>
    %41 = vector.broadcast %39 : vector<2x8x1xf32> to vector<2x8x8xf32>
    %42 = arith.mulf %40, %41 : vector<2x8x8xf32>
    %43 = tpu.transpose %39, [0, 2, 1] : vector<2x8x1xf32> -> vector<2x1x8xf32>
    %44 = vector.broadcast %43 : vector<2x1x8xf32> to vector<2x8x8xf32>
    %45 = arith.mulf %42, %44 : vector<2x8x8xf32>
    %46 = arith.mulf %2, %2 : vector<2x8x8xf32>
    %cst_20 = arith.constant dense<0.000000e+00> : vector<2x8xf32>
    %47 = vector.multi_reduction <add>, %46, %cst_20 [2] : vector<2x8x8xf32> to vector<2x8xf32>
    %48 = vector.shape_cast %47 : vector<2x8xf32> to vector<2x8x1xf32>
    %cst_21 = arith.constant 1.000000e-24 : f32
    %49 = vector.broadcast %cst_21 : f32 to vector<2x8x1xf32>
    %50 = arith.maximumf %48, %49 : vector<2x8x1xf32>
    %51 = math.rsqrt %50 : vector<2x8x1xf32>
    %cst_22 = arith.constant dense<0.000000e+00> : vector<2x8x8xf32>
    %52 = tpu.matmul %2, %2, %cst_22 {dimension_numbers = #tpu.dot_dimension_numbers<[2], [2], [1], [1], [0, 0, 0, 1, 1, 1], [0], [0]>} : vector<2x8x8xf32>, vector<2x8x8xf32>, vector<2x8x8xf32> -> vector<2x8x8xf32>
    %53 = vector.broadcast %51 : vector<2x8x1xf32> to vector<2x8x8xf32>
    %54 = arith.mulf %52, %53 : vector<2x8x8xf32>
    %55 = tpu.transpose %51, [0, 2, 1] : vector<2x8x1xf32> -> vector<2x1x8xf32>
    %56 = vector.broadcast %55 : vector<2x1x8xf32> to vector<2x8x8xf32>
    %57 = arith.mulf %54, %56 : vector<2x8x8xf32>
    %c0_23 = arith.constant 0 : index
    %c0_24 = arith.constant 0 : index
    %c0_25 = arith.constant 0 : index
    %58 = vector.load %arg14[%c0_23, %c0_24, %c0_25] : memref<2x24x128xf32, #tpu.memory_space<vmem>>, vector<2x8x8xf32>
    tpu.vector_store %arg14[%c0_23, %c0_24, %c0_25], %45 {strides = array<i32>} : memref<2x24x128xf32, #tpu.memory_space<vmem>>, vector<2x8x8xf32>,
    %c0_26 = arith.constant 0 : index
    %c8_27 = arith.constant 8 : index
    %c0_28 = arith.constant 0 : index
    %59 = vector.load %arg14[%c0_26, %c8_27, %c0_28] : memref<2x24x128xf32, #tpu.memory_space<vmem>>, vector<2x8x8xf32>
    tpu.vector_store %arg14[%c0_26, %c8_27, %c0_28], %33 {strides = array<i32>} : memref<2x24x128xf32, #tpu.memory_space<vmem>>, vector<2x8x8xf32>,
    %c0_29 = arith.constant 0 : index
    %c16 = arith.constant 16 : index
    %c0_30 = arith.constant 0 : index
    %60 = vector.load %arg14[%c0_29, %c16, %c0_30] : memref<2x24x128xf32, #tpu.memory_space<vmem>>, vector<2x8x8xf32>
    tpu.vector_store %arg14[%c0_29, %c16, %c0_30], %57 {strides = array<i32>} : memref<2x24x128xf32, #tpu.memory_space<vmem>>, vector<2x8x8xf32>,
    %61 = arith.addf %19, %2 : vector<2x8x8xf32>
    %cst_31 = arith.constant dense<0.000000e+00> : vector<2x8xf32>
    %62 = vector.multi_reduction <add>, %61, %cst_31 [1] : vector<2x8x8xf32> to vector<2x8xf32>
    %63 = vector.shape_cast %62 : vector<2x8xf32> to vector<2x1x8xf32>
    %cst_32 = arith.constant 9.99999996E-13 : f32
    %64 = vector.broadcast %cst_32 : f32 to vector<2x1x8xf32>
    %65 = arith.addf %63, %64 : vector<2x1x8xf32>
    %66 = tpu.reciprocal %65 {approx = true} : vector<2x1x8xf32> -> vector<2x1x8xf32>
    %67 = vector.broadcast %66 : vector<2x1x8xf32> to vector<2x8x8xf32>
    %68 = arith.mulf %61, %67 : vector<2x8x8xf32>
    %cst_33 = arith.constant dense<0.000000e+00> : vector<2x8xf32>
    %69 = vector.multi_reduction <add>, %61, %cst_33 [2] : vector<2x8x8xf32> to vector<2x8xf32>
    %70 = vector.shape_cast %69 : vector<2x8xf32> to vector<2x8x1xf32>
    %cst_34 = arith.constant 9.99999996E-13 : f32
    %71 = vector.broadcast %cst_34 : f32 to vector<2x8x1xf32>
    %72 = arith.addf %70, %71 : vector<2x8x1xf32>
    %73 = tpu.reciprocal %72 {approx = true} : vector<2x8x1xf32> -> vector<2x8x1xf32>
    %74 = vector.broadcast %73 : vector<2x8x1xf32> to vector<2x8x8xf32>
    %75 = arith.mulf %61, %74 : vector<2x8x8xf32>
    %76 = tpu.transpose %68, [0, 2, 1] : vector<2x8x8xf32> -> vector<2x8x8xf32>
    %77 = arith.truncf %76 : vector<2x8x8xf32> to vector<2x8x8xbf16>
    %cst_35 = arith.constant dense<0.000000e+00> : vector<2x8x128xf32>
    %78 = tpu.matmul %77, %1, %cst_35 {dimension_numbers = #tpu.dot_dimension_numbers<[2], [1], [1], [2], [0, 0, 0, 1, 1, 2], [0], [0]>} : vector<2x8x8xbf16>, vector<2x8x128xbf16>, vector<2x8x128xf32> -> vector<2x8x128xf32>
    %79 = vector.shape_cast %78 : vector<2x8x128xf32> to vector<16x128xf32>
    %80 = arith.truncf %79 : vector<16x128xf32> to vector<16x128xbf16>
    %c0_36 = arith.constant 0 : index
    %c0_37 = arith.constant 0 : index
    %81 = vector.load %arg5[%c0_36, %c0_37] : memref<128x128xbf16, #tpu.memory_space<vmem>>, vector<128x128xbf16>
    %cst_38 = arith.constant dense<0.000000e+00> : vector<16x128xf32>
    %82 = tpu.matmul %80, %81, %cst_38 {dimension_numbers = #tpu.dot_dimension_numbers<[1], [0], [0], [1], [0, 0, 1, 1], [], []>} : vector<16x128xbf16>, vector<128x128xbf16>, vector<16x128xf32> -> vector<16x128xf32>
    %c0_39 = arith.constant 0 : index
    %c0_40 = arith.constant 0 : index
    %83 = vector.load %arg6[%c0_39, %c0_40] : memref<1x128xf32, #tpu.memory_space<vmem>>, vector<1x128xf32>
    %84 = vector.broadcast %83 : vector<1x128xf32> to vector<16x128xf32>
    %85 = arith.addf %82, %84 : vector<16x128xf32>
    %c0_41 = arith.constant 0 : index
    %c0_42 = arith.constant 0 : index
    %86 = vector.load %arg7[%c0_41, %c0_42] : memref<1x128xf32, #tpu.memory_space<vmem>>, vector<1x128xf32>
    %87 = vector.broadcast %86 : vector<1x128xf32> to vector<16x128xf32>
    %88 = arith.mulf %85, %87 : vector<16x128xf32>
    %c0_43 = arith.constant 0 : index
    %c0_44 = arith.constant 0 : index
    %89 = vector.load %arg8[%c0_43, %c0_44] : memref<1x128xf32, #tpu.memory_space<vmem>>, vector<1x128xf32>
    %90 = vector.broadcast %89 : vector<1x128xf32> to vector<16x128xf32>
    %91 = arith.addf %88, %90 : vector<16x128xf32>
    %cst_45 = arith.constant 0.000000e+00 : f32
    %92 = vector.broadcast %cst_45 : f32 to vector<16x128xf32>
    %93 = arith.maximumf %91, %92 : vector<16x128xf32>
    %94 = vector.shape_cast %93 : vector<16x128xf32> to vector<2x8x128xf32>
    %95 = arith.truncf %75 : vector<2x8x8xf32> to vector<2x8x8xbf16>
    %96 = arith.truncf %94 : vector<2x8x128xf32> to vector<2x8x128xbf16>
    %cst_46 = arith.constant dense<0.000000e+00> : vector<2x8x128xf32>
    %97 = tpu.matmul %95, %96, %cst_46 {dimension_numbers = #tpu.dot_dimension_numbers<[2], [1], [1], [2], [0, 0, 0, 1, 1, 2], [0], [0]>} : vector<2x8x8xbf16>, vector<2x8x128xbf16>, vector<2x8x128xf32> -> vector<2x8x128xf32>
    %98 = vector.shape_cast %97 : vector<2x8x128xf32> to vector<16x128xf32>
    %99 = arith.truncf %98 : vector<16x128xf32> to vector<16x128xbf16>
    %c0_47 = arith.constant 0 : index
    %c0_48 = arith.constant 0 : index
    %100 = vector.load %arg9[%c0_47, %c0_48] : memref<128x128xbf16, #tpu.memory_space<vmem>>, vector<128x128xbf16>
    %cst_49 = arith.constant dense<0.000000e+00> : vector<16x128xf32>
    %101 = tpu.matmul %99, %100, %cst_49 {dimension_numbers = #tpu.dot_dimension_numbers<[1], [0], [0], [1], [0, 0, 1, 1], [], []>} : vector<16x128xbf16>, vector<128x128xbf16>, vector<16x128xf32> -> vector<16x128xf32>
    %c0_50 = arith.constant 0 : index
    %c0_51 = arith.constant 0 : index
    %102 = vector.load %arg10[%c0_50, %c0_51] : memref<1x128xf32, #tpu.memory_space<vmem>>, vector<1x128xf32>
    %103 = vector.broadcast %102 : vector<1x128xf32> to vector<16x128xf32>
    %104 = arith.addf %101, %103 : vector<16x128xf32>
    %c0_52 = arith.constant 0 : index
    %c0_53 = arith.constant 0 : index
    %105 = vector.load %arg11[%c0_52, %c0_53] : memref<1x128xf32, #tpu.memory_space<vmem>>, vector<1x128xf32>
    %106 = vector.broadcast %105 : vector<1x128xf32> to vector<16x128xf32>
    %107 = arith.mulf %104, %106 : vector<16x128xf32>
    %c0_54 = arith.constant 0 : index
    %c0_55 = arith.constant 0 : index
    %108 = vector.load %arg12[%c0_54, %c0_55] : memref<1x128xf32, #tpu.memory_space<vmem>>, vector<1x128xf32>
    %109 = vector.broadcast %108 : vector<1x128xf32> to vector<16x128xf32>
    %110 = arith.addf %107, %109 : vector<16x128xf32>
    %cst_56 = arith.constant 0.000000e+00 : f32
    %111 = vector.broadcast %cst_56 : f32 to vector<16x128xf32>
    %112 = arith.maximumf %110, %111 : vector<16x128xf32>
    %113 = vector.shape_cast %112 : vector<16x128xf32> to vector<2x8x128xf32>
    %114 = arith.addf %113, %0 : vector<2x8x128xf32>
    %c0_57 = arith.constant 0 : index
    %c0_58 = arith.constant 0 : index
    %c0_59 = arith.constant 0 : index
    %115 = vector.load %arg13[%c0_57, %c0_58, %c0_59] : memref<2x8x128xf32, #tpu.memory_space<vmem>>, vector<2x8x128xf32>
    tpu.vector_store %arg13[%c0_57, %c0_58, %c0_59], %114 {strides = array<i32>} : memref<2x8x128xf32, #tpu.memory_space<vmem>>, vector<2x8x128xf32>,
    return
  }
  func.func @transform_0(%arg0: i32) -> (i32, i32, i32) {
    %c0_i32 = arith.constant 0 : i32
    %c0_i32_0 = arith.constant 0 : i32
    %c0_i32_1 = arith.constant 0 : i32
    return %arg0, %c0_i32, %c0_i32_0 : i32, i32, i32
  }
  func.func @transform_1(%arg0: i32) -> (i32, i32, i32) {
    %c0_i32 = arith.constant 0 : i32
    %c0_i32_0 = arith.constant 0 : i32
    %c0_i32_1 = arith.constant 0 : i32
    return %arg0, %c0_i32, %c0_i32_0 : i32, i32, i32
  }
  func.func @transform_2(%arg0: i32) -> (i32, i32) {
    %c0_i32 = arith.constant 0 : i32
    %c0_i32_0 = arith.constant 0 : i32
    %c0_i32_1 = arith.constant 0 : i32
    return %c0_i32, %c0_i32_0 : i32, i32
  }
  func.func @transform_3(%arg0: i32) -> (i32, i32) {
    %c0_i32 = arith.constant 0 : i32
    %c0_i32_0 = arith.constant 0 : i32
    %c0_i32_1 = arith.constant 0 : i32
    return %c0_i32, %c0_i32_0 : i32, i32
  }
  func.func @transform_4(%arg0: i32) -> (i32, i32) {
    %c0_i32 = arith.constant 0 : i32
    %c0_i32_0 = arith.constant 0 : i32
    %c0_i32_1 = arith.constant 0 : i32
    return %c0_i32, %c0_i32_0 : i32, i32
  }
  func.func @transform_5(%arg0: i32) -> (i32, i32) {
    %c0_i32 = arith.constant 0 : i32
    %c0_i32_0 = arith.constant 0 : i32
    %c0_i32_1 = arith.constant 0 : i32
    return %c0_i32, %c0_i32_0 : i32, i32
  }
  func.func @transform_6(%arg0: i32) -> (i32, i32) {
    %c0_i32 = arith.constant 0 : i32
    %c0_i32_0 = arith.constant 0 : i32
    %c0_i32_1 = arith.constant 0 : i32
    return %c0_i32, %c0_i32_0 : i32, i32
  }
  func.func @transform_7(%arg0: i32) -> (i32, i32) {
    %c0_i32 = arith.constant 0 : i32
    %c0_i32_0 = arith.constant 0 : i32
    %c0_i32_1 = arith.constant 0 : i32
    return %c0_i32, %c0_i32_0 : i32, i32
  }
  func.func @transform_8(%arg0: i32) -> (i32, i32) {
    %c0_i32 = arith.constant 0 : i32
    %c0_i32_0 = arith.constant 0 : i32
    %c0_i32_1 = arith.constant 0 : i32
    return %c0_i32, %c0_i32_0 : i32, i32
  }
  func.func @transform_9(%arg0: i32) -> (i32, i32) {
    %c0_i32 = arith.constant 0 : i32
    %c0_i32_0 = arith.constant 0 : i32
    %c0_i32_1 = arith.constant 0 : i32
    return %c0_i32, %c0_i32_0 : i32, i32
  }
  func.func @transform_10(%arg0: i32) -> (i32, i32) {
    %c0_i32 = arith.constant 0 : i32
    %c0_i32_0 = arith.constant 0 : i32
    %c0_i32_1 = arith.constant 0 : i32
    return %c0_i32, %c0_i32_0 : i32, i32
  }
  func.func @transform_11(%arg0: i32) -> (i32, i32) {
    %c0_i32 = arith.constant 0 : i32
    %c0_i32_0 = arith.constant 0 : i32
    %c0_i32_1 = arith.constant 0 : i32
    return %c0_i32, %c0_i32_0 : i32, i32
  }
  func.func @transform_12(%arg0: i32) -> (i32, i32, i32) {
    %c0_i32 = arith.constant 0 : i32
    %c0_i32_0 = arith.constant 0 : i32
    %c0_i32_1 = arith.constant 0 : i32
    return %arg0, %c0_i32, %c0_i32_0 : i32, i32, i32
  }
  func.func @transform_13(%arg0: i32) -> (i32, i32, i32) {
    %c0_i32 = arith.constant 0 : i32
    %c0_i32_0 = arith.constant 0 : i32
    %c0_i32_1 = arith.constant 0 : i32
    return %arg0, %c0_i32, %c0_i32_0 : i32, i32, i32
  }
}

</mosaic_0001>

<llo_original>
// kernel: srfc_forward.1
$region0: #{srfc_forward.1}
  #allocation0 [shape = 'u32[]', space=smem, size = 0x4, offset = 0x4, fixed_abs, tag = 'smem constant byte address 0x4 - core index']
  #allocation1 [shape = 'u32[144,128]{1,0:T(1,128)}', space=vmem, size = 0x12000, scoped, tag = 'internal scratch']
  %s0 = inlined_call_operand.hbm [shape: f32[2,8,128], index: 0, kind: input, shape index: {}]
  %s1 = inlined_call_operand.hbm [shape: f32[2,8,8], index: 1, kind: input, shape index: {}]
  %s2 = inlined_call_operand.hbm [shape: f32[128,8], index: 2, kind: input, shape index: {}]
  %s3 = inlined_call_operand.hbm [shape: f32[1,8], index: 3, kind: input, shape index: {}]
  %s4 = inlined_call_operand.hbm [shape: bf16[128,128], index: 4, kind: input, shape index: {}]
  %s5 = inlined_call_operand.hbm [shape: f32[1,128], index: 5, kind: input, shape index: {}]
  %s6 = inlined_call_operand.hbm [shape: f32[1,128], index: 6, kind: input, shape index: {}]
  %s7 = inlined_call_operand.hbm [shape: f32[1,128], index: 7, kind: input, shape index: {}]
  %s8 = inlined_call_operand.hbm [shape: bf16[128,128], index: 8, kind: input, shape index: {}]
  %s9 = inlined_call_operand.hbm [shape: f32[1,128], index: 9, kind: input, shape index: {}]
  %s10 = inlined_call_operand.hbm [shape: f32[1,128], index: 10, kind: input, shape index: {}]
  %s11 = inlined_call_operand.hbm [shape: f32[1,128], index: 11, kind: input, shape index: {}]
  %s12 = inlined_call_operand.hbm [shape: f32[2,8,128], index: 12, kind: output, shape index: {0}]
  %s13 = inlined_call_operand.hbm [shape: f32[2,24,128], index: 13, kind: output, shape index: {1}]
  %14 = xla_tuple %s12, %s13
  %s15 = sld [smem:[#allocation0]]
  $region114: #{srfc_forward.1} parent=0
    _
  %s17 = ssub.s32 1, %s15
  %s18 = scalar_select 0, %s17, %s15
  $region1: #{srfc_forward.1} parent=0
    #allocation2 [shape = 'u8[8192]{0}', space=vmem, size = 0x2000, scoped, tag = 'input window, operand 0, single buffered']
    #allocation3 [shape = 's32[1]{0}', space=sflag, size = 0x4, scoped, tag = 'scoped memory for srfc_forward.1']
    #allocation4 [shape = 's32[1]{0}', space=sflag, size = 0x4, scoped, tag = 'scoped memory for srfc_forward.1']
    #allocation5 [shape = 'u8[8192]{0}', space=vmem, size = 0x2000, scoped, tag = 'input window, operand 1, single buffered']
    #allocation6 [shape = 's32[1]{0}', space=sflag, size = 0x4, scoped, tag = 'scoped memory for srfc_forward.1']
    #allocation7 [shape = 'u8[65536]{0}', space=vmem, size = 0x10000, scoped, tag = 'input window, operand 2, single buffered']
    #allocation8 [shape = 'u8[512]{0}', space=vmem, size = 0x400, scoped, tag = 'input window, operand 3, single buffered']
    #allocation9 [shape = 's32[1]{0}', space=sflag, size = 0x4, scoped, tag = 'scoped memory for srfc_forward.1']
    #allocation10 [shape = 'u8[32768]{0}', space=vmem, size = 0x8000, scoped, tag = 'input window, operand 4, single buffered']
    #allocation11 [shape = 'u8[512]{0}', space=vmem, size = 0x400, scoped, tag = 'input window, operand 5, single buffered']
    #allocation12 [shape = 's32[1]{0}', space=sflag, size = 0x4, scoped, tag = 'scoped memory for srfc_forward.1']
    #allocation13 [shape = 'u8[512]{0}', space=vmem, size = 0x400, scoped, tag = 'input window, operand 6, single buffered']
    #allocation14 [shape = 'u8[512]{0}', space=vmem, size = 0x400, scoped, tag = 'input window, operand 7, single buffered']
    #allocation15 [shape = 's32[1]{0}', space=sflag, size = 0x4, scoped, tag = 'scoped memory for srfc_forward.1']
    #allocation16 [shape = 'u8[32768]{0}', space=vmem, size = 0x8000, scoped, tag = 'input window, operand 8, single buffered']
    #allocation17 [shape = 'u8[512]{0}', space=vmem, size = 0x400, scoped, tag = 'input window, operand 9, single buffered']
    #allocation18 [shape = 's32[1]{0}', space=sflag, size = 0x4, scoped, tag = 'scoped memory for srfc_forward.1']
    #allocation19 [shape = 'u8[512]{0}', space=vmem, size = 0x400, scoped, tag = 'input window, operand 10, single buffered']
    #allocation20 [shape = 'u8[512]{0}', space=vmem, size = 0x400, scoped, tag = 'input window, operand 11, single buffered']
    #allocation21 [shape = 's32[1]{0}', space=sflag, size = 0x4, scoped, tag = 'scoped memory for srfc_forward.1']
    #allocation22 [shape = 'u8[8192]{0}', space=vmem, size = 0x2000, scoped, tag = 'output window, operand 0, single buffered']
    #allocation23 [shape = 'u8[24576]{0}', space=vmem, size = 0x6000, scoped, tag = 'output window, operand 1, single buffered']
    #allocation24 [shape = 's32[1]{0}', space=sflag, size = 0x4, scoped, tag = 'scoped memory for srfc_forward.1']
    %19 = vsyncpa [#allocation3], 0
    %20 = vsyncpa [#allocation6], 0
    %21 = vsyncpa [#allocation9], 0
    %22 = vsyncpa [#allocation12], 0
    %23 = vsyncpa [#allocation15], 0
    %24 = vsyncpa [#allocation18], 0
    %25 = vsyncpa [#allocation21], 0
    %26 = vsyncpa [#allocation4], 0
    %27 = vsyncpa [#allocation24], 0
    // Predicated region
    $region2: #{srfc_forward.1} parent=1 // pred_check
      _
    $region3: #{srfc_forward.1} parent=1 // pred_check_branch
      %29 = sbr.rel (0) target = $region5
    $region4: #{srfc_forward.1} parent=1 // pred_region
      %s31 = ssub.s32 256, 256
      %32 = vsyncadd [#allocation3], %s31
      %s33 = sshll.u32 [#allocation2], 4
      %s34 = int_to_ptr.vmem [resolvable:$true] %s33
      %39 = dma.hbm_to_vmem [thread:$0]  %s0, 256, %s34, [#allocation3], 128, 128, 8
    $region5: #{srfc_forward.1} parent=1 // pred_fallthru
      _
    // Predicated region
    $region6: #{srfc_forward.1} parent=1 // pred_check
      _
    $region7: #{srfc_forward.1} parent=1 // pred_check_branch
      %41 = sbr.rel (0) target = $region9
    $region8: #{srfc_forward.1} parent=1 // pred_region
      %s43 = ssub.s32 256, 256
      %44 = vsyncadd [#allocation6], %s43
      %s45 = sshll.u32 [#allocation5], 4
      %s46 = int_to_ptr.vmem [resolvable:$true] %s45
      %51 = dma.hbm_to_vmem [thread:$0]  %s1, 256, %s46, [#allocation6], 128, 128, 8
    $region9: #{srfc_forward.1} parent=1 // pred_fallthru
      _
    // Predicated region
    $region10: #{srfc_forward.1} parent=1 // pred_check
      _
    $region11: #{srfc_forward.1} parent=1 // pred_check_branch
      %53 = sbr.rel (0) target = $region13
    $region12: #{srfc_forward.1} parent=1 // pred_region
      %s55 = ssub.s32 2048, 2048
      %56 = vsyncadd [#allocation6], %s55
      %s57 = sshll.u32 [#allocation7], 4
      %s58 = int_to_ptr.vmem [resolvable:$true] %s57
      %63 = dma.hbm_to_vmem [thread:$0]  %s2, 2048, %s58, [#allocation6], 128, 128, 8
    $region13: #{srfc_forward.1} parent=1 // pred_fallthru
      _
    // Predicated region
    $region14: #{srfc_forward.1} parent=1 // pred_check
      _
    $region15: #{srfc_forward.1} parent=1 // pred_check_branch
      %65 = sbr.rel (0) target = $region17
    $region16: #{srfc_forward.1} parent=1 // pred_region
      %s67 = ssub.s32 16, 16
      %68 = vsyncadd [#allocation9], %s67
      %s70 = sshll.u32 [#allocation8], 4
      %s71 = int_to_ptr.vmem [resolvable:$true] %s70
      %73 = dma.hbm_to_vmem [thread:$0]  %s3, 16, %s71, [#allocation9]
    $region17: #{srfc_forward.1} parent=1 // pred_fallthru
      _
    // Predicated region
    $region18: #{srfc_forward.1} parent=1 // pred_check
      _
    $region19: #{srfc_forward.1} parent=1 // pred_check_branch
      %75 = sbr.rel (0) target = $region21
    $region20: #{srfc_forward.1} parent=1 // pred_region
      %s77 = ssub.s32 1024, 1024
      %78 = vsyncadd [#allocation9], %s77
      %s79 = sshll.u32 [#allocation10], 4
      %s80 = int_to_ptr.vmem [resolvable:$true] %s79
      %85 = dma.hbm_to_vmem [thread:$0]  %s4, 1024, %s80, [#allocation9], 64, 64, 4
    $region21: #{srfc_forward.1} parent=1 // pred_fallthru
      _
    // Predicated region
    $region22: #{srfc_forward.1} parent=1 // pred_check
      _
    $region23: #{srfc_forward.1} parent=1 // pred_check_branch
      %87 = sbr.rel (0) target = $region25
    $region24: #{srfc_forward.1} parent=1 // pred_region
      %s89 = ssub.s32 16, 16
      %90 = vsyncadd [#allocation12], %s89
      %s92 = sshll.u32 [#allocation11], 4
      %s93 = int_to_ptr.vmem [resolvable:$true] %s92
      %95 = dma.hbm_to_vmem [thread:$0]  %s5, 16, %s93, [#allocation12]
    $region25: #{srfc_forward.1} parent=1 // pred_fallthru
      _
    // Predicated region
    $region26: #{srfc_forward.1} parent=1 // pred_check
      _
    $region27: #{srfc_forward.1} parent=1 // pred_check_branch
      %97 = sbr.rel (0) target = $region29
    $region28: #{srfc_forward.1} parent=1 // pred_region
      %s99 = ssub.s32 16, 16
      %100 = vsyncadd [#allocation12], %s99
      %s102 = sshll.u32 [#allocation13], 4
      %s103 = int_to_ptr.vmem [resolvable:$true] %s102
      %105 = dma.hbm_to_vmem [thread:$0]  %s6, 16, %s103, [#allocation12]
    $region29: #{srfc_forward.1} parent=1 // pred_fallthru
      _
    // Predicated region
    $region30: #{srfc_forward.1} parent=1 // pred_check
      _
    $region31: #{srfc_forward.1} parent=1 // pred_check_branch
      %107 = sbr.rel (0) target = $region33
    $region32: #{srfc_forward.1} parent=1 // pred_region
      %s109 = ssub.s32 16, 16
      %110 = vsyncadd [#allocation15], %s109
      %s112 = sshll.u32 [#allocation14], 4
      %s113 = int_to_ptr.vmem [resolvable:$true] %s112
      %115 = dma.hbm_to_vmem [thread:$0]  %s7, 16, %s113, [#allocation15]
    $region33: #{srfc_forward.1} parent=1 // pred_fallthru
      _
    // Predicated region
    $region34: #{srfc_forward.1} parent=1 // pred_check
      _
    $region35: #{srfc_forward.1} parent=1 // pred_check_branch
      %117 = sbr.rel (0) target = $region37
    $region36: #{srfc_forward.1} parent=1 // pred_region
      %s119 = ssub.s32 1024, 1024
      %120 = vsyncadd [#allocation15], %s119
      %s121 = sshll.u32 [#allocation16], 4
      %s122 = int_to_ptr.vmem [resolvable:$true] %s121
      %127 = dma.hbm_to_vmem [thread:$0]  %s8, 1024, %s122, [#allocation15], 64, 64, 4
    $region37: #{srfc_forward.1} parent=1 // pred_fallthru
      _
    // Predicated region
    $region38: #{srfc_forward.1} parent=1 // pred_check
      _
    $region39: #{srfc_forward.1} parent=1 // pred_check_branch
      %129 = sbr.rel (0) target = $region41
    $region40: #{srfc_forward.1} parent=1 // pred_region
      %s131 = ssub.s32 16, 16
      %132 = vsyncadd [#allocation18], %s131
      %s134 = sshll.u32 [#allocation17], 4
      %s135 = int_to_ptr.vmem [resolvable:$true] %s134
      %137 = dma.hbm_to_vmem [thread:$0]  %s9, 16, %s135, [#allocation18]
    $region41: #{srfc_forward.1} parent=1 // pred_fallthru
      _
    // Predicated region
    $region42: #{srfc_forward.1} parent=1 // pred_check
      _
    $region43: #{srfc_forward.1} parent=1 // pred_check_branch
      %139 = sbr.rel (0) target = $region45
    $region44: #{srfc_forward.1} parent=1 // pred_region
      %s141 = ssub.s32 16, 16
      %142 = vsyncadd [#allocation18], %s141
      %s144 = sshll.u32 [#allocation19], 4
      %s145 = int_to_ptr.vmem [resolvable:$true] %s144
      %147 = dma.hbm_to_vmem [thread:$0]  %s10, 16, %s145, [#allocation18]
    $region45: #{srfc_forward.1} parent=1 // pred_fallthru
      _
    // Predicated region
    $region46: #{srfc_forward.1} parent=1 // pred_check
      _
    $region47: #{srfc_forward.1} parent=1 // pred_check_branch
      %149 = sbr.rel (0) target = $region49
    $region48: #{srfc_forward.1} parent=1 // pred_region
      %s151 = ssub.s32 16, 16
      %152 = vsyncadd [#allocation21], %s151
      %s154 = sshll.u32 [#allocation20], 4
      %s155 = int_to_ptr.vmem [resolvable:$true] %s154
      %157 = dma.hbm_to_vmem [thread:$0]  %s11, 16, %s155, [#allocation21]
    $region49: #{srfc_forward.1} parent=1 // pred_fallthru
      _
    // Predicated region
    $region50: #{srfc_forward.1} parent=1 // pred_check
      _
    $region51: #{srfc_forward.1} parent=1 // pred_check_branch
      %159 = sbr.rel (0) target = $region53
    $region52: #{srfc_forward.1} parent=1 // pred_region
      %160 = dma.done [#allocation3], 256
    $region53: #{srfc_forward.1} parent=1 // pred_fallthru
      _
    // Predicated region
    $region54: #{srfc_forward.1} parent=1 // pred_check
      _
    $region55: #{srfc_forward.1} parent=1 // pred_check_branch
      %162 = sbr.rel (0) target = $region57
    $region56: #{srfc_forward.1} parent=1 // pred_region
      %163 = dma.done [#allocation6], 256
    $region57: #{srfc_forward.1} parent=1 // pred_fallthru
      _
    // Predicated region
    $region58: #{srfc_forward.1} parent=1 // pred_check
      _
    $region59: #{srfc_forward.1} parent=1 // pred_check_branch
      %165 = sbr.rel (0) target = $region61
    $region60: #{srfc_forward.1} parent=1 // pred_region
      %166 = dma.done [#allocation6], 2048
    $region61: #{srfc_forward.1} parent=1 // pred_fallthru
      _
    // Predicated region
    $region62: #{srfc_forward.1} parent=1 // pred_check
      _
    $region63: #{srfc_forward.1} parent=1 // pred_check_branch
      %168 = sbr.rel (0) target = $region65
    $region64: #{srfc_forward.1} parent=1 // pred_region
      %169 = dma.done [#allocation9], 16
    $region65: #{srfc_forward.1} parent=1 // pred_fallthru
      _
    // Predicated region
    $region66: #{srfc_forward.1} parent=1 // pred_check
      _
    $region67: #{srfc_forward.1} parent=1 // pred_check_branch
      %171 = sbr.rel (0) target = $region69
    $region68: #{srfc_forward.1} parent=1 // pred_region
      %172 = dma.done [#allocation9], 1024
    $region69: #{srfc_forward.1} parent=1 // pred_fallthru
      _
    // Predicated region
    $region70: #{srfc_forward.1} parent=1 // pred_check
      _
    $region71: #{srfc_forward.1} parent=1 // pred_check_branch
      %174 = sbr.rel (0) target = $region73
    $region72: #{srfc_forward.1} parent=1 // pred_region
      %175 = dma.done [#allocation12], 16
    $region73: #{srfc_forward.1} parent=1 // pred_fallthru
      _
    // Predicated region
    $region74: #{srfc_forward.1} parent=1 // pred_check
      _
    $region75: #{srfc_forward.1} parent=1 // pred_check_branch
      %177 = sbr.rel (0) target = $region77
    $region76: #{srfc_forward.1} parent=1 // pred_region
      %178 = dma.done [#allocation12], 16
    $region77: #{srfc_forward.1} parent=1 // pred_fallthru
      _
    // Predicated region
    $region78: #{srfc_forward.1} parent=1 // pred_check
      _
    $region79: #{srfc_forward.1} parent=1 // pred_check_branch
      %180 = sbr.rel (0) target = $region81
    $region80: #{srfc_forward.1} parent=1 // pred_region
      %181 = dma.done [#allocation15], 16
    $region81: #{srfc_forward.1} parent=1 // pred_fallthru
      _
    // Predicated region
    $region82: #{srfc_forward.1} parent=1 // pred_check
      _
    $region83: #{srfc_forward.1} parent=1 // pred_check_branch
      %183 = sbr.rel (0) target = $region85
    $region84: #{srfc_forward.1} parent=1 // pred_region
      %184 = dma.done [#allocation15], 1024
    $region85: #{srfc_forward.1} parent=1 // pred_fallthru
      _
    // Predicated region
    $region86: #{srfc_forward.1} parent=1 // pred_check
      _
    $region87: #{srfc_forward.1} parent=1 // pred_check_branch
      %186 = sbr.rel (0) target = $region89
    $region88: #{srfc_forward.1} parent=1 // pred_region
      %187 = dma.done [#allocation18], 16
    $region89: #{srfc_forward.1} parent=1 // pred_fallthru
      _
    // Predicated region
    $region90: #{srfc_forward.1} parent=1 // pred_check
      _
    $region91: #{srfc_forward.1} parent=1 // pred_check_branch
      %189 = sbr.rel (0) target = $region93
    $region92: #{srfc_forward.1} parent=1 // pred_region
      %190 = dma.done [#allocation18], 16
    $region93: #{srfc_forward.1} parent=1 // pred_fallthru
      _
    // Predicated region
    $region94: #{srfc_forward.1} parent=1 // pred_check
      _
    $region95: #{srfc_forward.1} parent=1 // pred_check_branch
      %192 = sbr.rel (0) target = $region97
    $region96: #{srfc_forward.1} parent=1 // pred_region
      %193 = dma.done [#allocation21], 16
    $region97: #{srfc_forward.1} parent=1 // pred_fallthru
      _
    %v195 = vld [vmem:[#allocation2] sm:$0xff]
    %v196 = vld [vmem:[#allocation2 + $0x8] sm:$0xff]
    %v197 = vpack.c.bf16 %v195, %v195
    %v198 = vpack.c.bf16 %v196, %v196
    %v199 = vld [vmem:[#allocation5] sm:$0xff]
    %v200 = vld [vmem:[#allocation5 + $0x8] sm:$0xff]
    %v201 = vld [vmem:[#allocation7] sm:$0xff]
    %v202 = vld [vmem:[#allocation7 + $0x8] sm:$0xff]
    %v203 = vld [vmem:[#allocation7 + $0x10] sm:$0xff]
    %v204 = vld [vmem:[#allocation7 + $0x18] sm:$0xff]
    %v205 = vld [vmem:[#allocation7 + $0x20] sm:$0xff]
    %v206 = vld [vmem:[#allocation7 + $0x28] sm:$0xff]
    %v207 = vld [vmem:[#allocation7 + $0x30] sm:$0xff]
    %v208 = vld [vmem:[#allocation7 + $0x38] sm:$0xff]
    %v209 = vld [vmem:[#allocation7 + $0x40] sm:$0xff]
    %v210 = vld [vmem:[#allocation7 + $0x48] sm:$0xff]
    %v211 = vld [vmem:[#allocation7 + $0x50] sm:$0xff]
    %v212 = vld [vmem:[#allocation7 + $0x58] sm:$0xff]
    %v213 = vld [vmem:[#allocation7 + $0x60] sm:$0xff]
    %v214 = vld [vmem:[#allocation7 + $0x68] sm:$0xff]
    %v215 = vld [vmem:[#allocation7 + $0x70] sm:$0xff]
    %v216 = vld [vmem:[#allocation7 + $0x78] sm:$0xff]
    %v217 = vld [vmem:[#allocation8] sm:$0x1]
    %v219 = vlaneseq
    %v220 = vshrl.u32 %v219, 7
    %v221 = vsub.s32 0, %v220
    %v222 = vrot.slane %v217, %v221
    %224 = vmatprep.subr.mxu0 0.0
    %225 = vmatpush1.msra.mxu0 %v201
    %226 = vmatprep.subr.mxu0 0.0
    %227 = vmatpush1.msra.mxu0 %v202
    %228 = vmatprep.subr.mxu0 0.0
    %229 = vmatpush1.msra.mxu0 %v203
    %230 = vmatprep.subr.mxu0 0.0
    %231 = vmatpush1.msra.mxu0 %v204
    %232 = vmatprep.subr.mxu0 0.0
    %233 = vmatpush1.msra.mxu0 %v205
    %234 = vmatprep.subr.mxu0 0.0
    %235 = vmatpush1.msra.mxu0 %v206
    %236 = vmatprep.subr.mxu0 0.0
    %237 = vmatpush1.msra.mxu0 %v207
    %238 = vmatprep.subr.mxu0 0.0
    %239 = vmatpush1.msra.mxu0 %v208
    %240 = vmatprep.subr.mxu0 0.0
    %241 = vmatpush1.msra.mxu0 %v209
    %242 = vmatprep.subr.mxu0 0.0
    %243 = vmatpush1.msra.mxu0 %v210
    %244 = vmatprep.subr.mxu0 0.0
    %245 = vmatpush1.msra.mxu0 %v211
    %246 = vmatprep.subr.mxu0 0.0
    %247 = vmatpush1.msra.mxu0 %v212
    %248 = vmatprep.subr.mxu0 0.0
    %249 = vmatpush1.msra.mxu0 %v213
    %250 = vmatprep.subr.mxu0 0.0
    %251 = vmatpush1.msra.mxu0 %v214
    %252 = vmatprep.subr.mxu0 0.0
    %253 = vmatpush1.msra.mxu0 %v215
    %254 = vmatprep.subr.mxu0 0.0
    %255 = vmatpush1.msra.mxu0 %v216
    %256 = vmatprep.subr.mxu0 0.0
    %257 = vmatpush1.msra.mxu0 0.0
    %258 = vmatprep.subr.mxu0 0.0
    %259 = vmatpush1.msra.mxu0 0.0
    %260 = vmatprep.subr.mxu0 0.0
    %261 = vmatpush1.msra.mxu0 0.0
    %262 = vmatprep.subr.mxu0 0.0
    %263 = vmatpush1.msra.mxu0 0.0
    %264 = vmatprep.subr.mxu0 0.0
    %265 = vmatpush1.msra.mxu0 0.0
    %266 = vmatprep.subr.mxu0 0.0
    %267 = vmatpush1.msra.mxu0 0.0
    %268 = vmatprep.subr.mxu0 0.0
    %269 = vmatpush1.msra.mxu0 0.0
    %270 = vmatprep.subr.mxu0 0.0
    %271 = vmatpush1.msra.mxu0 0.0
    %272 = vmatprep.subr.mxu0 0.0
    %273 = vmatpush1.msra.mxu0 0.0
    %274 = vmatprep.subr.mxu0 0.0
    %275 = vmatpush1.msra.mxu0 0.0
    %276 = vmatprep.subr.mxu0 0.0
    %277 = vmatpush1.msra.mxu0 0.0
    %278 = vmatprep.subr.mxu0 0.0
    %279 = vmatpush1.msra.mxu0 0.0
    %280 = vmatprep.subr.mxu0 0.0
    %281 = vmatpush1.msra.mxu0 0.0
    %282 = vmatprep.subr.mxu0 0.0
    %283 = vmatpush1.msra.mxu0 0.0
    %284 = vmatprep.subr.mxu0 0.0
    %285 = vmatpush1.msra.mxu0 0.0
    %286 = vmatprep.subr.mxu0 0.0
    %287 = vmatpush1.msra.mxu0 0.0
    %288 = vmatprep.mubr.f32.mxu0 0.0
    %289 = vmatmul.mubr.f32.gmra.mrb[0].mxu0 %v195
    %v290 = vpop.f32.mrb[0].mxu0
    %v291 = vadd.f32 %v222, %v290
    %v292 = vpop.f32.mrb[0].mxu0
    %293 = vmatprep.mubr.f32.mxu0 0.0
    %294 = vmatmul.mubr.f32.gmra.mrb[0].mxu0 %v196
    %v295 = vpop.f32.mrb[0].mxu0
    %v296 = vadd.f32 %v222, %v295
    %v297 = vpop.f32.mrb[0].mxu0
    %298 = vdwg.mxu0
    %vm299 = vcmask 64512
    %v300 = vsel %vm299, %v291, -inf
    %301 = vmax.xlane.f32.xlu0 %v300
    %v302 = vpop.xlane.xlu0 %301
    %v303 = vsel %vm299, %v296, -inf
    %304 = vmax.xlane.f32.xlu0 %v303
    %v305 = vpop.xlane.xlu0 %304
    %v306 = vsub.f32 %v291, %v302
    %v307 = vsub.f32 %v296, %v305
    %v308 = vmul.f32 %v306, 1.442695
    %v309 = vpow.pop %v308
    %v310 = vmul.f32 %v307, 1.442695
    %v311 = vpow.pop %v310
    %v312 = vsel %vm299, %v309, 0.0
    %313 = vadd.xlane.f32.xlu0 %v312
    %v314 = vpop.xlane.xlu0 %313
    %v315 = vsel %vm299, %v311, 0.0
    %316 = vadd.xlane.f32.xlu0 %v315
    %v317 = vpop.xlane.xlu0 %316
    %v318 = vrcp.pop %v314
    %v319 = vrcp.pop %v317
    %v320 = vmul.f32 %v309, %v318
    %v321 = vmul.f32 %v311, %v319
    %vm322 = vcmask 1047616
    %323 = vst.msk [vmem:[#allocation23] sm:$0xff] %vm322, 0.0
    %324 = vst.msk [vmem:[#allocation23 + $0x8] sm:$0xff] %vm322, 0.0
    %325 = vst.msk [vmem:[#allocation23 + $0x10] sm:$0xff] %vm322, 0.0
    %326 = vst.msk [vmem:[#allocation23 + $0x18] sm:$0xff] %vm322, 0.0
    %327 = vst.msk [vmem:[#allocation23 + $0x20] sm:$0xff] %vm322, 0.0
    %328 = vst.msk [vmem:[#allocation23 + $0x28] sm:$0xff] %vm322, 0.0
    %v329 = vmul.f32 %v195, %v195
    %v330 = vmul.f32 %v196, %v196
    %331 = vadd.xlane.f32.xlu0 %v329
    %v332 = vpop.xlane.xlu0 %331
    %333 = vadd.xlane.f32.xlu0 %v330
    %v334 = vpop.xlane.xlu0 %333
    %v335 = vmax.f32 %v332, 1e-24
    %v336 = vmax.f32 %v334, 1e-24
    %v337 = vrsqrt.pop %v335
    %v338 = vrsqrt.pop %v336
    %339 = vmatprep.subr.mxu0 0.0
    %340 = vmatpush1.xpose.msra.mxu0 %v195
    %341 = vmatprep.subr.mxu0 0.0
    %342 = vmatpush1.xpose.msra.mxu0 0.0
    %343 = vmatprep.subr.mxu0 0.0
    %344 = vmatpush1.xpose.msra.mxu0 0.0
    %345 = vmatprep.subr.mxu0 0.0
    %346 = vmatpush1.xpose.msra.mxu0 0.0
    %347 = vmatprep.subr.mxu0 0.0
    %348 = vmatpush1.xpose.msra.mxu0 0.0
    %349 = vmatprep.subr.mxu0 0.0
    %350 = vmatpush1.xpose.msra.mxu0 0.0
    %351 = vmatprep.subr.mxu0 0.0
    %352 = vmatpush1.xpose.msra.mxu0 0.0
    %353 = vmatprep.subr.mxu0 0.0
    %354 = vmatpush1.xpose.msra.mxu0 0.0
    %355 = vmatprep.subr.mxu0 0.0
    %356 = vmatpush1.xpose.msra.mxu0 0.0
    %357 = vmatprep.subr.mxu0 0.0
    %358 = vmatpush1.xpose.msra.mxu0 0.0
    %359 = vmatprep.subr.mxu0 0.0
    %360 = vmatpush1.xpose.msra.mxu0 0.0
    %361 = vmatprep.subr.mxu0 0.0
    %362 = vmatpush1.xpose.msra.mxu0 0.0
    %363 = vmatprep.subr.mxu0 0.0
    %364 = vmatpush1.xpose.msra.mxu0 0.0
    %365 = vmatprep.subr.mxu0 0.0
    %366 = vmatpush1.xpose.msra.mxu0 0.0
    %367 = vmatprep.subr.mxu0 0.0
    %368 = vmatpush1.xpose.msra.mxu0 0.0
    %369 = vmatprep.subr.mxu0 0.0
    %370 = vmatpush1.xpose.msra.mxu0 0.0
    %371 = vmatprep.subr.mxu0 0.0
    %372 = vmatpush1.xpose.msra.mxu0 0.0
    %373 = vmatprep.subr.mxu0 0.0
    %374 = vmatpush1.xpose.msra.mxu0 0.0
    %375 = vmatprep.subr.mxu0 0.0
    %376 = vmatpush1.xpose.msra.mxu0 0.0
    %377 = vmatprep.subr.mxu0 0.0
    %378 = vmatpush1.xpose.msra.mxu0 0.0
    %379 = vmatprep.subr.mxu0 0.0
    %380 = vmatpush1.xpose.msra.mxu0 0.0
    %381 = vmatprep.subr.mxu0 0.0
    %382 = vmatpush1.xpose.msra.mxu0 0.0
    %383 = vmatprep.subr.mxu0 0.0
    %384 = vmatpush1.xpose.msra.mxu0 0.0
    %385 = vmatprep.subr.mxu0 0.0
    %386 = vmatpush1.xpose.msra.mxu0 0.0
    %387 = vmatprep.subr.mxu0 0.0
    %388 = vmatpush1.xpose.msra.mxu0 0.0
    %389 = vmatprep.subr.mxu0 0.0
    %390 = vmatpush1.xpose.msra.mxu0 0.0
    %391 = vmatprep.subr.mxu0 0.0
    %392 = vmatpush1.xpose.msra.mxu0 0.0
    %393 = vmatprep.subr.mxu0 0.0
    %394 = vmatpush1.xpose.msra.mxu0 0.0
    %395 = vmatprep.subr.mxu0 0.0
    %396 = vmatpush1.xpose.msra.mxu0 0.0
    %397 = vmatprep.subr.mxu0 0.0
    %398 = vmatpush1.xpose.msra.mxu0 0.0
    %399 = vmatprep.subr.mxu0 0.0
    %400 = vmatpush1.xpose.msra.mxu0 0.0
    %401 = vmatprep.subr.mxu0 0.0
    %402 = vmatpush1.xpose.msra.mxu0 0.0
    %403 = vmatprep.mubr.f32.mxu0 0.0
    %404 = vmatmul.mubr.f32.gmra.mrb[0].mxu0 %v195
    %v405 = vpop.f32.mrb[0].mxu0
    %v406 = vadd.f32 0.0, %v405
    %v407 = vpop.f32.mrb[0].mxu0
    %408 = vdwg.mxu0
    %409 = vmatprep.subr.mxu0 0.0
    %410 = vmatpush1.xpose.msra.mxu0 %v196
    %411 = vmatprep.subr.mxu0 0.0
    %412 = vmatpush1.xpose.msra.mxu0 0.0
    %413 = vmatprep.subr.mxu0 0.0
    %414 = vmatpush1.xpose.msra.mxu0 0.0
    %415 = vmatprep.subr.mxu0 0.0
    %416 = vmatpush1.xpose.msra.mxu0 0.0
    %417 = vmatprep.subr.mxu0 0.0
    %418 = vmatpush1.xpose.msra.mxu0 0.0
    %419 = vmatprep.subr.mxu0 0.0
    %420 = vmatpush1.xpose.msra.mxu0 0.0
    %421 = vmatprep.subr.mxu0 0.0
    %422 = vmatpush1.xpose.msra.mxu0 0.0
    %423 = vmatprep.subr.mxu0 0.0
    %424 = vmatpush1.xpose.msra.mxu0 0.0
    %425 = vmatprep.subr.mxu0 0.0
    %426 = vmatpush1.xpose.msra.mxu0 0.0
    %427 = vmatprep.subr.mxu0 0.0
    %428 = vmatpush1.xpose.msra.mxu0 0.0
    %429 = vmatprep.subr.mxu0 0.0
    %430 = vmatpush1.xpose.msra.mxu0 0.0
    %431 = vmatprep.subr.mxu0 0.0
    %432 = vmatpush1.xpose.msra.mxu0 0.0
    %433 = vmatprep.subr.mxu0 0.0
    %434 = vmatpush1.xpose.msra.mxu0 0.0
    %435 = vmatprep.subr.mxu0 0.0
    %436 = vmatpush1.xpose.msra.mxu0 0.0
    %437 = vmatprep.subr.mxu0 0.0
    %438 = vmatpush1.xpose.msra.mxu0 0.0
    %439 = vmatprep.subr.mxu0 0.0
    %440 = vmatpush1.xpose.msra.mxu0 0.0
    %441 = vmatprep.subr.mxu0 0.0
    %442 = vmatpush1.xpose.msra.mxu0 0.0
    %443 = vmatprep.subr.mxu0 0.0
    %444 = vmatpush1.xpose.msra.mxu0 0.0
    %445 = vmatprep.subr.mxu0 0.0
    %446 = vmatpush1.xpose.msra.mxu0 0.0
    %447 = vmatprep.subr.mxu0 0.0
    %448 = vmatpush1.xpose.msra.mxu0 0.0
    %449 = vmatprep.subr.mxu0 0.0
    %450 = vmatpush1.xpose.msra.mxu0 0.0
    %451 = vmatprep.subr.mxu0 0.0
    %452 = vmatpush1.xpose.msra.mxu0 0.0
    %453 = vmatprep.subr.mxu0 0.0
    %454 = vmatpush1.xpose.msra.mxu0 0.0
    %455 = vmatprep.subr.mxu0 0.0
    %456 = vmatpush1.xpose.msra.mxu0 0.0
    %457 = vmatprep.subr.mxu0 0.0
    %458 = vmatpush1.xpose.msra.mxu0 0.0
    %459 = vmatprep.subr.mxu0 0.0
    %460 = vmatpush1.xpose.msra.mxu0 0.0
    %461 = vmatprep.subr.mxu0 0.0
    %462 = vmatpush1.xpose.msra.mxu0 0.0
    %463 = vmatprep.subr.mxu0 0.0
    %464 = vmatpush1.xpose.msra.mxu0 0.0
    %465 = vmatprep.subr.mxu0 0.0
    %466 = vmatpush1.xpose.msra.mxu0 0.0
    %467 = vmatprep.subr.mxu0 0.0
    %468 = vmatpush1.xpose.msra.mxu0 0.0
    %469 = vmatprep.subr.mxu0 0.0
    %470 = vmatpush1.xpose.msra.mxu0 0.0
    %471 = vmatprep.subr.mxu0 0.0
    %472 = vmatpush1.xpose.msra.mxu0 0.0
    %473 = vmatprep.mubr.f32.mxu0 0.0
    %474 = vmatmul.mubr.f32.gmra.mrb[0].mxu0 %v196
    %v475 = vpop.f32.mrb[0].mxu0
    %v476 = vadd.f32 0.0, %v475
    %v477 = vpop.f32.mrb[0].mxu0
    %478 = vdwg.mxu0
    %v479 = vmul.f32 %v406, %v337
    %v480 = vmul.f32 %v476, %v338
    %481 = vxpose.xlu0.b32.start [1/16] %v337, 128
    %482 = vxpose.xlu0.b32.cont [2/16] 0.0, 128
    %483 = vxpose.xlu0.b32.cont [3/16] 0.0, 128
    %484 = vxpose.xlu0.b32.cont [4/16] 0.0, 128
    %485 = vxpose.xlu0.b32.cont [5/16] 0.0, 128
    %486 = vxpose.xlu0.b32.cont [6/16] 0.0, 128
    %487 = vxpose.xlu0.b32.cont [7/16] 0.0, 128
    %488 = vxpose.xlu0.b32.cont [8/16] 0.0, 128
    %489 = vxpose.xlu0.b32.cont [9/16] 0.0, 128
    %490 = vxpose.xlu0.b32.cont [10/16] 0.0, 128
    %491 = vxpose.xlu0.b32.cont [11/16] 0.0, 128
    %492 = vxpose.xlu0.b32.cont [12/16] 0.0, 128
    %493 = vxpose.xlu0.b32.cont [13/16] 0.0, 128
    %494 = vxpose.xlu0.b32.cont [14/16] 0.0, 128
    %495 = vxpose.xlu0.b32.cont [15/16] 0.0, 128
    %496 = vxpose.xlu0.b32.end [16/16] 0.0, 128
    %v497 = vpop.trf.xlu0
    %v498 = vpop.trf.xlu0
    %v499 = vpop.trf.xlu0
    %v500 = vpop.trf.xlu0
    %v501 = vpop.trf.xlu0
    %v502 = vpop.trf.xlu0
    %v503 = vpop.trf.xlu0
    %v504 = vpop.trf.xlu0
    %v505 = vpop.trf.xlu0
    %v506 = vpop.trf.xlu0
    %v507 = vpop.trf.xlu0
    %v508 = vpop.trf.xlu0
    %v509 = vpop.trf.xlu0
    %v510 = vpop.trf.xlu0
    %v511 = vpop.trf.xlu0
    %v512 = vpop.trf.xlu0
    %513 = vxpose.xlu0.b32.start [1/16] %v338, 128
    %514 = vxpose.xlu0.b32.cont [2/16] 0.0, 128
    %515 = vxpose.xlu0.b32.cont [3/16] 0.0, 128
    %516 = vxpose.xlu0.b32.cont [4/16] 0.0, 128
    %517 = vxpose.xlu0.b32.cont [5/16] 0.0, 128
    %518 = vxpose.xlu0.b32.cont [6/16] 0.0, 128
    %519 = vxpose.xlu0.b32.cont [7/16] 0.0, 128
    %520 = vxpose.xlu0.b32.cont [8/16] 0.0, 128
    %521 = vxpose.xlu0.b32.cont [9/16] 0.0, 128
    %522 = vxpose.xlu0.b32.cont [10/16] 0.0, 128
    %523 = vxpose.xlu0.b32.cont [11/16] 0.0, 128
    %524 = vxpose.xlu0.b32.cont [12/16] 0.0, 128
    %525 = vxpose.xlu0.b32.cont [13/16] 0.0, 128
    %526 = vxpose.xlu0.b32.cont [14/16] 0.0, 128
    %527 = vxpose.xlu0.b32.cont [15/16] 0.0, 128
    %528 = vxpose.xlu0.b32.end [16/16] 0.0, 128
    %v529 = vpop.trf.xlu0
    %v530 = vpop.trf.xlu0
    %v531 = vpop.trf.xlu0
    %v532 = vpop.trf.xlu0
    %v533 = vpop.trf.xlu0
    %v534 = vpop.trf.xlu0
    %v535 = vpop.trf.xlu0
    %v536 = vpop.trf.xlu0
    %v537 = vpop.trf.xlu0
    %v538 = vpop.trf.xlu0
    %v539 = vpop.trf.xlu0
    %v540 = vpop.trf.xlu0
    %v541 = vpop.trf.xlu0
    %v542 = vpop.trf.xlu0
    %v543 = vpop.trf.xlu0
    %v544 = vpop.trf.xlu0
    %v545 = vlaneseq
    %v546 = vshrl.u32 %v545, 7
    %v547 = vsub.s32 0, %v546
    %v548 = vrot.slane %v497, %v547
    %v549 = vlaneseq
    %v550 = vshrl.u32 %v549, 7
    %v551 = vsub.s32 0, %v550
    %v552 = vrot.slane %v529, %v551
    %v553 = vmul.f32 %v479, %v548
    %v554 = vmul.f32 %v480, %v552
    %v555 = vmul.f32 %v320, %v320
    %v556 = vmul.f32 %v321, %v321
    %v557 = vsel %vm299, %v555, 0.0
    %558 = vadd.xlane.f32.xlu0 %v557
    %v559 = vpop.xlane.xlu0 %558
    %v560 = vsel %vm299, %v556, 0.0
    %561 = vadd.xlane.f32.xlu0 %v560
    %v562 = vpop.xlane.xlu0 %561
    %v563 = vmax.f32 %v559, 1e-24
    %v564 = vmax.f32 %v562, 1e-24
    %v565 = vrsqrt.pop %v563
    %v566 = vrsqrt.pop %v564
    %v568 = vsel %vm299, %v320, 0
    %570 = vmatprep.subr.mxu0 0.0
    %571 = vmatpush1.xpose.msra.mxu0 %v568
    %572 = vmatprep.subr.mxu0 0.0
    %573 = vmatpush1.xpose.msra.mxu0 0.0
    %574 = vmatprep.subr.mxu0 0.0
    %575 = vmatpush1.xpose.msra.mxu0 0.0
    %576 = vmatprep.subr.mxu0 0.0
    %577 = vmatpush1.xpose.msra.mxu0 0.0
    %578 = vmatprep.subr.mxu0 0.0
    %579 = vmatpush1.xpose.msra.mxu0 0.0
    %580 = vmatprep.subr.mxu0 0.0
    %581 = vmatpush1.xpose.msra.mxu0 0.0
    %582 = vmatprep.subr.mxu0 0.0
    %583 = vmatpush1.xpose.msra.mxu0 0.0
    %584 = vmatprep.subr.mxu0 0.0
    %585 = vmatpush1.xpose.msra.mxu0 0.0
    %586 = vmatprep.subr.mxu0 0.0
    %587 = vmatpush1.xpose.msra.mxu0 0.0
    %588 = vmatprep.subr.mxu0 0.0
    %589 = vmatpush1.xpose.msra.mxu0 0.0
    %590 = vmatprep.subr.mxu0 0.0
    %591 = vmatpush1.xpose.msra.mxu0 0.0
    %592 = vmatprep.subr.mxu0 0.0
    %593 = vmatpush1.xpose.msra.mxu0 0.0
    %594 = vmatprep.subr.mxu0 0.0
    %595 = vmatpush1.xpose.msra.mxu0 0.0
    %596 = vmatprep.subr.mxu0 0.0
    %597 = vmatpush1.xpose.msra.mxu0 0.0
    %598 = vmatprep.subr.mxu0 0.0
    %599 = vmatpush1.xpose.msra.mxu0 0.0
    %600 = vmatprep.subr.mxu0 0.0
    %601 = vmatpush1.xpose.msra.mxu0 0.0
    %602 = vmatprep.subr.mxu0 0.0
    %603 = vmatpush1.xpose.msra.mxu0 0.0
    %604 = vmatprep.subr.mxu0 0.0
    %605 = vmatpush1.xpose.msra.mxu0 0.0
    %606 = vmatprep.subr.mxu0 0.0
    %607 = vmatpush1.xpose.msra.mxu0 0.0
    %608 = vmatprep.subr.mxu0 0.0
    %609 = vmatpush1.xpose.msra.mxu0 0.0
    %610 = vmatprep.subr.mxu0 0.0
    %611 = vmatpush1.xpose.msra.mxu0 0.0
    %612 = vmatprep.subr.mxu0 0.0
    %613 = vmatpush1.xpose.msra.mxu0 0.0
    %614 = vmatprep.subr.mxu0 0.0
    %615 = vmatpush1.xpose.msra.mxu0 0.0
    %616 = vmatprep.subr.mxu0 0.0
    %617 = vmatpush1.xpose.msra.mxu0 0.0
    %618 = vmatprep.subr.mxu0 0.0
    %619 = vmatpush1.xpose.msra.mxu0 0.0
    %620 = vmatprep.subr.mxu0 0.0
    %621 = vmatpush1.xpose.msra.mxu0 0.0
    %622 = vmatprep.subr.mxu0 0.0
    %623 = vmatpush1.xpose.msra.mxu0 0.0
    %624 = vmatprep.subr.mxu0 0.0
    %625 = vmatpush1.xpose.msra.mxu0 0.0
    %626 = vmatprep.subr.mxu0 0.0
    %627 = vmatpush1.xpose.msra.mxu0 0.0
    %628 = vmatprep.subr.mxu0 0.0
    %629 = vmatpush1.xpose.msra.mxu0 0.0
    %630 = vmatprep.subr.mxu0 0.0
    %631 = vmatpush1.xpose.msra.mxu0 0.0
    %632 = vmatprep.subr.mxu0 0.0
    %633 = vmatpush1.xpose.msra.mxu0 0.0
    %634 = vmatprep.mubr.f32.mxu0 0.0
    %635 = vmatmul.mubr.f32.gmra.mrb[0].mxu0 %v568
    %v636 = vpop.f32.mrb[0].mxu0
    %v637 = vadd.f32 0.0, %v636
    %v638 = vpop.f32.mrb[0].mxu0
    %639 = vdwg.mxu0
    %v641 = vsel %vm299, %v321, 0
    %643 = vmatprep.subr.mxu0 0.0
    %644 = vmatpush1.xpose.msra.mxu0 %v641
    %645 = vmatprep.subr.mxu0 0.0
    %646 = vmatpush1.xpose.msra.mxu0 0.0
    %647 = vmatprep.subr.mxu0 0.0
    %648 = vmatpush1.xpose.msra.mxu0 0.0
    %649 = vmatprep.subr.mxu0 0.0
    %650 = vmatpush1.xpose.msra.mxu0 0.0
    %651 = vmatprep.subr.mxu0 0.0
    %652 = vmatpush1.xpose.msra.mxu0 0.0
    %653 = vmatprep.subr.mxu0 0.0
    %654 = vmatpush1.xpose.msra.mxu0 0.0
    %655 = vmatprep.subr.mxu0 0.0
    %656 = vmatpush1.xpose.msra.mxu0 0.0
    %657 = vmatprep.subr.mxu0 0.0
    %658 = vmatpush1.xpose.msra.mxu0 0.0
    %659 = vmatprep.subr.mxu0 0.0
    %660 = vmatpush1.xpose.msra.mxu0 0.0
    %661 = vmatprep.subr.mxu0 0.0
    %662 = vmatpush1.xpose.msra.mxu0 0.0
    %663 = vmatprep.subr.mxu0 0.0
    %664 = vmatpush1.xpose.msra.mxu0 0.0
    %665 = vmatprep.subr.mxu0 0.0
    %666 = vmatpush1.xpose.msra.mxu0 0.0
    %667 = vmatprep.subr.mxu0 0.0
    %668 = vmatpush1.xpose.msra.mxu0 0.0
    %669 = vmatprep.subr.mxu0 0.0
    %670 = vmatpush1.xpose.msra.mxu0 0.0
    %671 = vmatprep.subr.mxu0 0.0
    %672 = vmatpush1.xpose.msra.mxu0 0.0
    %673 = vmatprep.subr.mxu0 0.0
    %674 = vmatpush1.xpose.msra.mxu0 0.0
    %675 = vmatprep.subr.mxu0 0.0
    %676 = vmatpush1.xpose.msra.mxu0 0.0
    %677 = vmatprep.subr.mxu0 0.0
    %678 = vmatpush1.xpose.msra.mxu0 0.0
    %679 = vmatprep.subr.mxu0 0.0
    %680 = vmatpush1.xpose.msra.mxu0 0.0
    %681 = vmatprep.subr.mxu0 0.0
    %682 = vmatpush1.xpose.msra.mxu0 0.0
    %683 = vmatprep.subr.mxu0 0.0
    %684 = vmatpush1.xpose.msra.mxu0 0.0
    %685 = vmatprep.subr.mxu0 0.0
    %686 = vmatpush1.xpose.msra.mxu0 0.0
    %687 = vmatprep.subr.mxu0 0.0
    %688 = vmatpush1.xpose.msra.mxu0 0.0
    %689 = vmatprep.subr.mxu0 0.0
    %690 = vmatpush1.xpose.msra.mxu0 0.0
    %691 = vmatprep.subr.mxu0 0.0
    %692 = vmatpush1.xpose.msra.mxu0 0.0
    %693 = vmatprep.subr.mxu0 0.0
    %694 = vmatpush1.xpose.msra.mxu0 0.0
    %695 = vmatprep.subr.mxu0 0.0
    %696 = vmatpush1.xpose.msra.mxu0 0.0
    %697 = vmatprep.subr.mxu0 0.0
    %698 = vmatpush1.xpose.msra.mxu0 0.0
    %699 = vmatprep.subr.mxu0 0.0
    %700 = vmatpush1.xpose.msra.mxu0 0.0
    %701 = vmatprep.subr.mxu0 0.0
    %702 = vmatpush1.xpose.msra.mxu0 0.0
    %703 = vmatprep.subr.mxu0 0.0
    %704 = vmatpush1.xpose.msra.mxu0 0.0
    %705 = vmatprep.subr.mxu0 0.0
    %706 = vmatpush1.xpose.msra.mxu0 0.0
    %707 = vmatprep.mubr.f32.mxu0 0.0
    %708 = vmatmul.mubr.f32.gmra.mrb[0].mxu0 %v641
    %v709 = vpop.f32.mrb[0].mxu0
    %v710 = vadd.f32 0.0, %v709
    %v711 = vpop.f32.mrb[0].mxu0
    %712 = vdwg.mxu0
    %v713 = vmul.f32 %v637, %v565
    %v714 = vmul.f32 %v710, %v566
    %715 = vxpose.xlu0.b32.start [1/16] %v565, 128
    %716 = vxpose.xlu0.b32.cont [2/16] 0.0, 128
    %717 = vxpose.xlu0.b32.cont [3/16] 0.0, 128
    %718 = vxpose.xlu0.b32.cont [4/16] 0.0, 128
    %719 = vxpose.xlu0.b32.cont [5/16] 0.0, 128
    %720 = vxpose.xlu0.b32.cont [6/16] 0.0, 128
    %721 = vxpose.xlu0.b32.cont [7/16] 0.0, 128
    %722 = vxpose.xlu0.b32.cont [8/16] 0.0, 128
    %723 = vxpose.xlu0.b32.cont [9/16] 0.0, 128
    %724 = vxpose.xlu0.b32.cont [10/16] 0.0, 128
    %725 = vxpose.xlu0.b32.cont [11/16] 0.0, 128
    %726 = vxpose.xlu0.b32.cont [12/16] 0.0, 128
    %727 = vxpose.xlu0.b32.cont [13/16] 0.0, 128
    %728 = vxpose.xlu0.b32.cont [14/16] 0.0, 128
    %729 = vxpose.xlu0.b32.cont [15/16] 0.0, 128
    %730 = vxpose.xlu0.b32.end [16/16] 0.0, 128
    %v731 = vpop.trf.xlu0
    %v732 = vpop.trf.xlu0
    %v733 = vpop.trf.xlu0
    %v734 = vpop.trf.xlu0
    %v735 = vpop.trf.xlu0
    %v736 = vpop.trf.xlu0
    %v737 = vpop.trf.xlu0
    %v738 = vpop.trf.xlu0
    %v739 = vpop.trf.xlu0
    %v740 = vpop.trf.xlu0
    %v741 = vpop.trf.xlu0
    %v742 = vpop.trf.xlu0
    %v743 = vpop.trf.xlu0
    %v744 = vpop.trf.xlu0
    %v745 = vpop.trf.xlu0
    %v746 = vpop.trf.xlu0
    %747 = vxpose.xlu0.b32.start [1/16] %v566, 128
    %748 = vxpose.xlu0.b32.cont [2/16] 0.0, 128
    %749 = vxpose.xlu0.b32.cont [3/16] 0.0, 128
    %750 = vxpose.xlu0.b32.cont [4/16] 0.0, 128
    %751 = vxpose.xlu0.b32.cont [5/16] 0.0, 128
    %752 = vxpose.xlu0.b32.cont [6/16] 0.0, 128
    %753 = vxpose.xlu0.b32.cont [7/16] 0.0, 128
    %754 = vxpose.xlu0.b32.cont [8/16] 0.0, 128
    %755 = vxpose.xlu0.b32.cont [9/16] 0.0, 128
    %756 = vxpose.xlu0.b32.cont [10/16] 0.0, 128
    %757 = vxpose.xlu0.b32.cont [11/16] 0.0, 128
    %758 = vxpose.xlu0.b32.cont [12/16] 0.0, 128
    %759 = vxpose.xlu0.b32.cont [13/16] 0.0, 128
    %760 = vxpose.xlu0.b32.cont [14/16] 0.0, 128
    %761 = vxpose.xlu0.b32.cont [15/16] 0.0, 128
    %762 = vxpose.xlu0.b32.end [16/16] 0.0, 128
    %v763 = vpop.trf.xlu0
    %v764 = vpop.trf.xlu0
    %v765 = vpop.trf.xlu0
    %v766 = vpop.trf.xlu0
    %v767 = vpop.trf.xlu0
    %v768 = vpop.trf.xlu0
    %v769 = vpop.trf.xlu0
    %v770 = vpop.trf.xlu0
    %v771 = vpop.trf.xlu0
    %v772 = vpop.trf.xlu0
    %v773 = vpop.trf.xlu0
    %v774 = vpop.trf.xlu0
    %v775 = vpop.trf.xlu0
    %v776 = vpop.trf.xlu0
    %v777 = vpop.trf.xlu0
    %v778 = vpop.trf.xlu0
    %v779 = vlaneseq
    %v780 = vshrl.u32 %v779, 7
    %v781 = vsub.s32 0, %v780
    %v782 = vrot.slane %v731, %v781
    %v783 = vlaneseq
    %v784 = vshrl.u32 %v783, 7
    %v785 = vsub.s32 0, %v784
    %v786 = vrot.slane %v763, %v785
    %v787 = vmul.f32 %v713, %v782
    %v788 = vmul.f32 %v714, %v786
    %v789 = vmul.f32 %v199, %v199
    %v790 = vmul.f32 %v200, %v200
    %v791 = vsel %vm299, %v789, 0.0
    %792 = vadd.xlane.f32.xlu0 %v791
    %v793 = vpop.xlane.xlu0 %792
    %v794 = vsel %vm299, %v790, 0.0
    %795 = vadd.xlane.f32.xlu0 %v794
    %v796 = vpop.xlane.xlu0 %795
    %v797 = vmax.f32 %v793, 1e-24
    %v798 = vmax.f32 %v796, 1e-24
    %v799 = vrsqrt.pop %v797
    %v800 = vrsqrt.pop %v798
    %v802 = vsel %vm299, %v199, 0
    %804 = vmatprep.subr.mxu0 0.0
    %805 = vmatpush1.xpose.msra.mxu0 %v802
    %806 = vmatprep.subr.mxu0 0.0
    %807 = vmatpush1.xpose.msra.mxu0 0.0
    %808 = vmatprep.subr.mxu0 0.0
    %809 = vmatpush1.xpose.msra.mxu0 0.0
    %810 = vmatprep.subr.mxu0 0.0
    %811 = vmatpush1.xpose.msra.mxu0 0.0
    %812 = vmatprep.subr.mxu0 0.0
    %813 = vmatpush1.xpose.msra.mxu0 0.0
    %814 = vmatprep.subr.mxu0 0.0
    %815 = vmatpush1.xpose.msra.mxu0 0.0
    %816 = vmatprep.subr.mxu0 0.0
    %817 = vmatpush1.xpose.msra.mxu0 0.0
    %818 = vmatprep.subr.mxu0 0.0
    %819 = vmatpush1.xpose.msra.mxu0 0.0
    %820 = vmatprep.subr.mxu0 0.0
    %821 = vmatpush1.xpose.msra.mxu0 0.0
    %822 = vmatprep.subr.mxu0 0.0
    %823 = vmatpush1.xpose.msra.mxu0 0.0
    %824 = vmatprep.subr.mxu0 0.0
    %825 = vmatpush1.xpose.msra.mxu0 0.0
    %826 = vmatprep.subr.mxu0 0.0
    %827 = vmatpush1.xpose.msra.mxu0 0.0
    %828 = vmatprep.subr.mxu0 0.0
    %829 = vmatpush1.xpose.msra.mxu0 0.0
    %830 = vmatprep.subr.mxu0 0.0
    %831 = vmatpush1.xpose.msra.mxu0 0.0
    %832 = vmatprep.subr.mxu0 0.0
    %833 = vmatpush1.xpose.msra.mxu0 0.0
    %834 = vmatprep.subr.mxu0 0.0
    %835 = vmatpush1.xpose.msra.mxu0 0.0
    %836 = vmatprep.subr.mxu0 0.0
    %837 = vmatpush1.xpose.msra.mxu0 0.0
    %838 = vmatprep.subr.mxu0 0.0
    %839 = vmatpush1.xpose.msra.mxu0 0.0
    %840 = vmatprep.subr.mxu0 0.0
    %841 = vmatpush1.xpose.msra.mxu0 0.0
    %842 = vmatprep.subr.mxu0 0.0
    %843 = vmatpush1.xpose.msra.mxu0 0.0
    %844 = vmatprep.subr.mxu0 0.0
    %845 = vmatpush1.xpose.msra.mxu0 0.0
    %846 = vmatprep.subr.mxu0 0.0
    %847 = vmatpush1.xpose.msra.mxu0 0.0
    %848 = vmatprep.subr.mxu0 0.0
    %849 = vmatpush1.xpose.msra.mxu0 0.0
    %850 = vmatprep.subr.mxu0 0.0
    %851 = vmatpush1.xpose.msra.mxu0 0.0
    %852 = vmatprep.subr.mxu0 0.0
    %853 = vmatpush1.xpose.msra.mxu0 0.0
    %854 = vmatprep.subr.mxu0 0.0
    %855 = vmatpush1.xpose.msra.mxu0 0.0
    %856 = vmatprep.subr.mxu0 0.0
    %857 = vmatpush1.xpose.msra.mxu0 0.0
    %858 = vmatprep.subr.mxu0 0.0
    %859 = vmatpush1.xpose.msra.mxu0 0.0
    %860 = vmatprep.subr.mxu0 0.0
    %861 = vmatpush1.xpose.msra.mxu0 0.0
    %862 = vmatprep.subr.mxu0 0.0
    %863 = vmatpush1.xpose.msra.mxu0 0.0
    %864 = vmatprep.subr.mxu0 0.0
    %865 = vmatpush1.xpose.msra.mxu0 0.0
    %866 = vmatprep.subr.mxu0 0.0
    %867 = vmatpush1.xpose.msra.mxu0 0.0
    %868 = vmatprep.mubr.f32.mxu0 0.0
    %869 = vmatmul.mubr.f32.gmra.mrb[0].mxu0 %v802
    %v870 = vpop.f32.mrb[0].mxu0
    %v871 = vadd.f32 0.0, %v870
    %v872 = vpop.f32.mrb[0].mxu0
    %873 = vdwg.mxu0
    %v875 = vsel %vm299, %v200, 0
    %877 = vmatprep.subr.mxu0 0.0
    %878 = vmatpush1.xpose.msra.mxu0 %v875
    %879 = vmatprep.subr.mxu0 0.0
    %880 = vmatpush1.xpose.msra.mxu0 0.0
    %881 = vmatprep.subr.mxu0 0.0
    %882 = vmatpush1.xpose.msra.mxu0 0.0
    %883 = vmatprep.subr.mxu0 0.0
    %884 = vmatpush1.xpose.msra.mxu0 0.0
    %885 = vmatprep.subr.mxu0 0.0
    %886 = vmatpush1.xpose.msra.mxu0 0.0
    %887 = vmatprep.subr.mxu0 0.0
    %888 = vmatpush1.xpose.msra.mxu0 0.0
    %889 = vmatprep.subr.mxu0 0.0
    %890 = vmatpush1.xpose.msra.mxu0 0.0
    %891 = vmatprep.subr.mxu0 0.0
    %892 = vmatpush1.xpose.msra.mxu0 0.0
    %893 = vmatprep.subr.mxu0 0.0
    %894 = vmatpush1.xpose.msra.mxu0 0.0
    %895 = vmatprep.subr.mxu0 0.0
    %896 = vmatpush1.xpose.msra.mxu0 0.0
    %897 = vmatprep.subr.mxu0 0.0
    %898 = vmatpush1.xpose.msra.mxu0 0.0
    %899 = vmatprep.subr.mxu0 0.0
    %900 = vmatpush1.xpose.msra.mxu0 0.0
    %901 = vmatprep.subr.mxu0 0.0
    %902 = vmatpush1.xpose.msra.mxu0 0.0
    %903 = vmatprep.subr.mxu0 0.0
    %904 = vmatpush1.xpose.msra.mxu0 0.0
    %905 = vmatprep.subr.mxu0 0.0
    %906 = vmatpush1.xpose.msra.mxu0 0.0
    %907 = vmatprep.subr.mxu0 0.0
    %908 = vmatpush1.xpose.msra.mxu0 0.0
    %909 = vmatprep.subr.mxu0 0.0
    %910 = vmatpush1.xpose.msra.mxu0 0.0
    %911 = vmatprep.subr.mxu0 0.0
    %912 = vmatpush1.xpose.msra.mxu0 0.0
    %913 = vmatprep.subr.mxu0 0.0
    %914 = vmatpush1.xpose.msra.mxu0 0.0
    %915 = vmatprep.subr.mxu0 0.0
    %916 = vmatpush1.xpose.msra.mxu0 0.0
    %917 = vmatprep.subr.mxu0 0.0
    %918 = vmatpush1.xpose.msra.mxu0 0.0
    %919 = vmatprep.subr.mxu0 0.0
    %920 = vmatpush1.xpose.msra.mxu0 0.0
    %921 = vmatprep.subr.mxu0 0.0
    %922 = vmatpush1.xpose.msra.mxu0 0.0
    %923 = vmatprep.subr.mxu0 0.0
    %924 = vmatpush1.xpose.msra.mxu0 0.0
    %925 = vmatprep.subr.mxu0 0.0
    %926 = vmatpush1.xpose.msra.mxu0 0.0
    %927 = vmatprep.subr.mxu0 0.0
    %928 = vmatpush1.xpose.msra.mxu0 0.0
    %929 = vmatprep.subr.mxu0 0.0
    %930 = vmatpush1.xpose.msra.mxu0 0.0
    %931 = vmatprep.subr.mxu0 0.0
    %932 = vmatpush1.xpose.msra.mxu0 0.0
    %933 = vmatprep.subr.mxu0 0.0
    %934 = vmatpush1.xpose.msra.mxu0 0.0
    %935 = vmatprep.subr.mxu0 0.0
    %936 = vmatpush1.xpose.msra.mxu0 0.0
    %937 = vmatprep.subr.mxu0 0.0
    %938 = vmatpush1.xpose.msra.mxu0 0.0
    %939 = vmatprep.subr.mxu0 0.0
    %940 = vmatpush1.xpose.msra.mxu0 0.0
    %941 = vmatprep.mubr.f32.mxu0 0.0
    %942 = vmatmul.mubr.f32.gmra.mrb[0].mxu0 %v875
    %v943 = vpop.f32.mrb[0].mxu0
    %v944 = vadd.f32 0.0, %v943
    %v945 = vpop.f32.mrb[0].mxu0
    %946 = vdwg.mxu0
    %v947 = vmul.f32 %v871, %v799
    %v948 = vmul.f32 %v944, %v800
    %949 = vxpose.xlu0.b32.start [1/16] %v799, 128
    %950 = vxpose.xlu0.b32.cont [2/16] 0.0, 128
    %951 = vxpose.xlu0.b32.cont [3/16] 0.0, 128
    %952 = vxpose.xlu0.b32.cont [4/16] 0.0, 128
    %953 = vxpose.xlu0.b32.cont [5/16] 0.0, 128
    %954 = vxpose.xlu0.b32.cont [6/16] 0.0, 128
    %955 = vxpose.xlu0.b32.cont [7/16] 0.0, 128
    %956 = vxpose.xlu0.b32.cont [8/16] 0.0, 128
    %957 = vxpose.xlu0.b32.cont [9/16] 0.0, 128
    %958 = vxpose.xlu0.b32.cont [10/16] 0.0, 128
    %959 = vxpose.xlu0.b32.cont [11/16] 0.0, 128
    %960 = vxpose.xlu0.b32.cont [12/16] 0.0, 128
    %961 = vxpose.xlu0.b32.cont [13/16] 0.0, 128
    %962 = vxpose.xlu0.b32.cont [14/16] 0.0, 128
    %963 = vxpose.xlu0.b32.cont [15/16] 0.0, 128
    %964 = vxpose.xlu0.b32.end [16/16] 0.0, 128
    %v965 = vpop.trf.xlu0
    %v966 = vpop.trf.xlu0
    %v967 = vpop.trf.xlu0
    %v968 = vpop.trf.xlu0
    %v969 = vpop.trf.xlu0
    %v970 = vpop.trf.xlu0
    %v971 = vpop.trf.xlu0
    %v972 = vpop.trf.xlu0
    %v973 = vpop.trf.xlu0
    %v974 = vpop.trf.xlu0
    %v975 = vpop.trf.xlu0
    %v976 = vpop.trf.xlu0
    %v977 = vpop.trf.xlu0
    %v978 = vpop.trf.xlu0
    %v979 = vpop.trf.xlu0
    %v980 = vpop.trf.xlu0
    %981 = vxpose.xlu0.b32.start [1/16] %v800, 128
    %982 = vxpose.xlu0.b32.cont [2/16] 0.0, 128
    %983 = vxpose.xlu0.b32.cont [3/16] 0.0, 128
    %984 = vxpose.xlu0.b32.cont [4/16] 0.0, 128
    %985 = vxpose.xlu0.b32.cont [5/16] 0.0, 128
    %986 = vxpose.xlu0.b32.cont [6/16] 0.0, 128
    %987 = vxpose.xlu0.b32.cont [7/16] 0.0, 128
    %988 = vxpose.xlu0.b32.cont [8/16] 0.0, 128
    %989 = vxpose.xlu0.b32.cont [9/16] 0.0, 128
    %990 = vxpose.xlu0.b32.cont [10/16] 0.0, 128
    %991 = vxpose.xlu0.b32.cont [11/16] 0.0, 128
    %992 = vxpose.xlu0.b32.cont [12/16] 0.0, 128
    %993 = vxpose.xlu0.b32.cont [13/16] 0.0, 128
    %994 = vxpose.xlu0.b32.cont [14/16] 0.0, 128
    %995 = vxpose.xlu0.b32.cont [15/16] 0.0, 128
    %996 = vxpose.xlu0.b32.end [16/16] 0.0, 128
    %v997 = vpop.trf.xlu0
    %v998 = vpop.trf.xlu0
    %v999 = vpop.trf.xlu0
    %v1000 = vpop.trf.xlu0
    %v1001 = vpop.trf.xlu0
    %v1002 = vpop.trf.xlu0
    %v1003 = vpop.trf.xlu0
    %v1004 = vpop.trf.xlu0
    %v1005 = vpop.trf.xlu0
    %v1006 = vpop.trf.xlu0
    %v1007 = vpop.trf.xlu0
    %v1008 = vpop.trf.xlu0
    %v1009 = vpop.trf.xlu0
    %v1010 = vpop.trf.xlu0
    %v1011 = vpop.trf.xlu0
    %v1012 = vpop.trf.xlu0
    %v1013 = vlaneseq
    %v1014 = vshrl.u32 %v1013, 7
    %v1015 = vsub.s32 0, %v1014
    %v1016 = vrot.slane %v965, %v1015
    %v1017 = vlaneseq
    %v1018 = vshrl.u32 %v1017, 7
    %v1019 = vsub.s32 0, %v1018
    %v1020 = vrot.slane %v997, %v1019
    %v1021 = vmul.f32 %v947, %v1016
    %v1022 = vmul.f32 %v948, %v1020
    %1023 = vst.msk [vmem:[#allocation23] sm:$0xff] %vm299, %v787
    %1024 = vst.msk [vmem:[#allocation23 + $0x18] sm:$0xff] %vm299, %v788
    %1025 = vst.msk [vmem:[#allocation23 + $0x8] sm:$0xff] %vm299, %v553
    %1026 = vst.msk [vmem:[#allocation23 + $0x20] sm:$0xff] %vm299, %v554
    %1027 = vst.msk [vmem:[#allocation23 + $0x10] sm:$0xff] %vm299, %v1021
    %1028 = vst.msk [vmem:[#allocation23 + $0x28] sm:$0xff] %vm299, %v1022
    %v1029 = vadd.f32 %v320, %v199
    %v1030 = vadd.f32 %v321, %v200
    %v1031 = vsel %vm299, %v1029, 0.0
    %v1032 = vrot.slane %v1031, 4
    %v1033 = vadd.f32 %v1031, %v1032
    %v1034 = vrot.slane %v1033, 2
    %v1035 = vadd.f32 %v1033, %v1034
    %v1036 = vrot.slane %v1035, 1
    %v1037 = vadd.f32 %v1035, %v1036
    %v1038 = vsel %vm299, %v1030, 0.0
    %v1039 = vrot.slane %v1038, 4
    %v1040 = vadd.f32 %v1038, %v1039
    %v1041 = vrot.slane %v1040, 2
    %v1042 = vadd.f32 %v1040, %v1041
    %v1043 = vrot.slane %v1042, 1
    %v1044 = vadd.f32 %v1042, %v1043
    %v1045 = vadd.f32 %v1037, 1e-12
    %v1046 = vadd.f32 %v1044, 1e-12
    %v1047 = vrcp.pop %v1045
    %v1048 = vrcp.pop %v1046
    %v1049 = vmul.f32 %v1029, %v1047
    %v1050 = vmul.f32 %v1030, %v1048
    %1051 = vadd.xlane.f32.xlu0 %v1031
    %v1052 = vpop.xlane.xlu0 %1051
    %1053 = vadd.xlane.f32.xlu0 %v1038
    %v1054 = vpop.xlane.xlu0 %1053
    %v1055 = vadd.f32 %v1052, 1e-12
    %v1056 = vadd.f32 %v1054, 1e-12
    %v1057 = vrcp.pop %v1055
    %v1058 = vrcp.pop %v1056
    %v1059 = vmul.f32 %v1029, %v1057
    %v1060 = vmul.f32 %v1030, %v1058
    %1061 = vxpose.xlu0.b32.start [1/16] %v1049, 128
    %1062 = vxpose.xlu0.b32.cont [2/16] 0.0, 128
    %1063 = vxpose.xlu0.b32.cont [3/16] 0.0, 128
    %1064 = vxpose.xlu0.b32.cont [4/16] 0.0, 128
    %1065 = vxpose.xlu0.b32.cont [5/16] 0.0, 128
    %1066 = vxpose.xlu0.b32.cont [6/16] 0.0, 128
    %1067 = vxpose.xlu0.b32.cont [7/16] 0.0, 128
    %1068 = vxpose.xlu0.b32.cont [8/16] 0.0, 128
    %1069 = vxpose.xlu0.b32.cont [9/16] 0.0, 128
    %1070 = vxpose.xlu0.b32.cont [10/16] 0.0, 128
    %1071 = vxpose.xlu0.b32.cont [11/16] 0.0, 128
    %1072 = vxpose.xlu0.b32.cont [12/16] 0.0, 128
    %1073 = vxpose.xlu0.b32.cont [13/16] 0.0, 128
    %1074 = vxpose.xlu0.b32.cont [14/16] 0.0, 128
    %1075 = vxpose.xlu0.b32.cont [15/16] 0.0, 128
    %1076 = vxpose.xlu0.b32.end [16/16] 0.0, 128
    %v1077 = vpop.trf.xlu0
    %v1078 = vpop.trf.xlu0
    %v1079 = vpop.trf.xlu0
    %v1080 = vpop.trf.xlu0
    %v1081 = vpop.trf.xlu0
    %v1082 = vpop.trf.xlu0
    %v1083 = vpop.trf.xlu0
    %v1084 = vpop.trf.xlu0
    %v1085 = vpop.trf.xlu0
    %v1086 = vpop.trf.xlu0
    %v1087 = vpop.trf.xlu0
    %v1088 = vpop.trf.xlu0
    %v1089 = vpop.trf.xlu0
    %v1090 = vpop.trf.xlu0
    %v1091 = vpop.trf.xlu0
    %v1092 = vpop.trf.xlu0
    %1093 = vxpose.xlu0.b32.start [1/16] %v1050, 128
    %1094 = vxpose.xlu0.b32.cont [2/16] 0.0, 128
    %1095 = vxpose.xlu0.b32.cont [3/16] 0.0, 128
    %1096 = vxpose.xlu0.b32.cont [4/16] 0.0, 128
    %1097 = vxpose.xlu0.b32.cont [5/16] 0.0, 128
    %1098 = vxpose.xlu0.b32.cont [6/16] 0.0, 128
    %1099 = vxpose.xlu0.b32.cont [7/16] 0.0, 128
    %1100 = vxpose.xlu0.b32.cont [8/16] 0.0, 128
    %1101 = vxpose.xlu0.b32.cont [9/16] 0.0, 128
    %1102 = vxpose.xlu0.b32.cont [10/16] 0.0, 128
    %1103 = vxpose.xlu0.b32.cont [11/16] 0.0, 128
    %1104 = vxpose.xlu0.b32.cont [12/16] 0.0, 128
    %1105 = vxpose.xlu0.b32.cont [13/16] 0.0, 128
    %1106 = vxpose.xlu0.b32.cont [14/16] 0.0, 128
    %1107 = vxpose.xlu0.b32.cont [15/16] 0.0, 128
    %1108 = vxpose.xlu0.b32.end [16/16] 0.0, 128
    %v1109 = vpop.trf.xlu0
    %v1110 = vpop.trf.xlu0
    %v1111 = vpop.trf.xlu0
    %v1112 = vpop.trf.xlu0
    %v1113 = vpop.trf.xlu0
    %v1114 = vpop.trf.xlu0
    %v1115 = vpop.trf.xlu0
    %v1116 = vpop.trf.xlu0
    %v1117 = vpop.trf.xlu0
    %v1118 = vpop.trf.xlu0
    %v1119 = vpop.trf.xlu0
    %v1120 = vpop.trf.xlu0
    %v1121 = vpop.trf.xlu0
    %v1122 = vpop.trf.xlu0
    %v1123 = vpop.trf.xlu0
    %v1124 = vpop.trf.xlu0
    %v1125 = vpack.c.bf16 %v1077, %v1077
    %v1126 = vpack.c.bf16 %v1109, %v1109
    %v1128 = vsel %vm299, %v1125, 0
    %vm1130 = vcmask 1043456
    %v1132 = vsel %vm1130, %v197, 0
    %1134 = vmatprep.subr.bf16.mxu0 0
    %1135 = vmatpush1.bf16.msra.mxu0 %v1132
    %1136 = vmatprep.subr.bf16.mxu0 0
    %1137 = vmatpush1.bf16.msra.mxu0 0
    %1138 = vmatprep.subr.bf16.mxu0 0
    %1139 = vmatpush1.bf16.msra.mxu0 0
    %1140 = vmatprep.subr.bf16.mxu0 0
    %1141 = vmatpush1.bf16.msra.mxu0 0
    %1142 = vmatprep.subr.bf16.mxu0 0
    %1143 = vmatpush1.bf16.msra.mxu0 0
    %1144 = vmatprep.subr.bf16.mxu0 0
    %1145 = vmatpush1.bf16.msra.mxu0 0
    %1146 = vmatprep.subr.bf16.mxu0 0
    %1147 = vmatpush1.bf16.msra.mxu0 0
    %1148 = vmatprep.subr.bf16.mxu0 0
    %1149 = vmatpush1.bf16.msra.mxu0 0
    %1150 = vmatprep.subr.bf16.mxu0 0
    %1151 = vmatpush1.bf16.msra.mxu0 0
    %1152 = vmatprep.subr.bf16.mxu0 0
    %1153 = vmatpush1.bf16.msra.mxu0 0
    %1154 = vmatprep.subr.bf16.mxu0 0
    %1155 = vmatpush1.bf16.msra.mxu0 0
    %1156 = vmatprep.subr.bf16.mxu0 0
    %1157 = vmatpush1.bf16.msra.mxu0 0
    %1158 = vmatprep.subr.bf16.mxu0 0
    %1159 = vmatpush1.bf16.msra.mxu0 0
    %1160 = vmatprep.subr.bf16.mxu0 0
    %1161 = vmatpush1.bf16.msra.mxu0 0
    %1162 = vmatprep.subr.bf16.mxu0 0
    %1163 = vmatpush1.bf16.msra.mxu0 0
    %1164 = vmatprep.subr.bf16.mxu0 0
    %1165 = vmatpush1.bf16.msra.mxu0 0
    %1166 = vmatprep.mubr.bf16.mxu0 0
    %1167 = vmatmul.mubr.bf16.gmra.mrb[0].mxu0 %v1128
    %v1168 = vpop.f32.mrb[0].mxu0
    %v1169 = vadd.f32 0.0, %v1168
    %v1170 = vpop.f32.mrb[0].mxu0
    %v1171 = vpop.f32.mrb[0].mxu0
    %v1172 = vpop.f32.mrb[0].mxu0
    %1173 = vdwg.mxu0
    %v1175 = vsel %vm299, %v1126, 0
    %v1178 = vsel %vm1130, %v198, 0
    %1180 = vmatprep.subr.bf16.mxu0 0
    %1181 = vmatpush1.bf16.msra.mxu0 %v1178
    %1182 = vmatprep.subr.bf16.mxu0 0
    %1183 = vmatpush1.bf16.msra.mxu0 0
    %1184 = vmatprep.subr.bf16.mxu0 0
    %1185 = vmatpush1.bf16.msra.mxu0 0
    %1186 = vmatprep.subr.bf16.mxu0 0
    %1187 = vmatpush1.bf16.msra.mxu0 0
    %1188 = vmatprep.subr.bf16.mxu0 0
    %1189 = vmatpush1.bf16.msra.mxu0 0
    %1190 = vmatprep.subr.bf16.mxu0 0
    %1191 = vmatpush1.bf16.msra.mxu0 0
    %1192 = vmatprep.subr.bf16.mxu0 0
    %1193 = vmatpush1.bf16.msra.mxu0 0
    %1194 = vmatprep.subr.bf16.mxu0 0
    %1195 = vmatpush1.bf16.msra.mxu0 0
    %1196 = vmatprep.subr.bf16.mxu0 0
    %1197 = vmatpush1.bf16.msra.mxu0 0
    %1198 = vmatprep.subr.bf16.mxu0 0
    %1199 = vmatpush1.bf16.msra.mxu0 0
    %1200 = vmatprep.subr.bf16.mxu0 0
    %1201 = vmatpush1.bf16.msra.mxu0 0
    %1202 = vmatprep.subr.bf16.mxu0 0
    %1203 = vmatpush1.bf16.msra.mxu0 0
    %1204 = vmatprep.subr.bf16.mxu0 0
    %1205 = vmatpush1.bf16.msra.mxu0 0
    %1206 = vmatprep.subr.bf16.mxu0 0
    %1207 = vmatpush1.bf16.msra.mxu0 0
    %1208 = vmatprep.subr.bf16.mxu0 0
    %1209 = vmatpush1.bf16.msra.mxu0 0
    %1210 = vmatprep.subr.bf16.mxu0 0
    %1211 = vmatpush1.bf16.msra.mxu0 0
    %1212 = vmatprep.mubr.bf16.mxu0 0
    %1213 = vmatmul.mubr.bf16.gmra.mrb[0].mxu0 %v1175
    %v1214 = vpop.f32.mrb[0].mxu0
    %v1215 = vadd.f32 0.0, %v1214
    %v1216 = vpop.f32.mrb[0].mxu0
    %v1217 = vpop.f32.mrb[0].mxu0
    %v1218 = vpop.f32.mrb[0].mxu0
    %1219 = vdwg.mxu0
    %v1220 = vpack.c.bf16 %v1215, %v1169
    %v1221 = vld [vmem:[#allocation10] sm:$0xf]
    %v1222 = vld [vmem:[#allocation10 + $0x4] sm:$0xf]
    %v1223 = vld [vmem:[#allocation10 + $0x8] sm:$0xf]
    %v1224 = vld [vmem:[#allocation10 + $0xc] sm:$0xf]
    %v1225 = vld [vmem:[#allocation10 + $0x10] sm:$0xf]
    %v1226 = vld [vmem:[#allocation10 + $0x14] sm:$0xf]
    %v1227 = vld [vmem:[#allocation10 + $0x18] sm:$0xf]
    %v1228 = vld [vmem:[#allocation10 + $0x1c] sm:$0xf]
    %v1229 = vld [vmem:[#allocation10 + $0x20] sm:$0xf]
    %v1230 = vld [vmem:[#allocation10 + $0x24] sm:$0xf]
    %v1231 = vld [vmem:[#allocation10 + $0x28] sm:$0xf]
    %v1232 = vld [vmem:[#allocation10 + $0x2c] sm:$0xf]
    %v1233 = vld [vmem:[#allocation10 + $0x30] sm:$0xf]
    %v1234 = vld [vmem:[#allocation10 + $0x34] sm:$0xf]
    %v1235 = vld [vmem:[#allocation10 + $0x38] sm:$0xf]
    %v1236 = vld [vmem:[#allocation10 + $0x3c] sm:$0xf]
    %v1237 = vld [vmem:[#allocation11] sm:$0x1]
    %v1239 = vlaneseq
    %v1240 = vshrl.u32 %v1239, 7
    %v1241 = vsub.s32 0, %v1240
    %v1242 = vrot.slane %v1237, %v1241
    %v1260 = vunpack.c.l.b16 %v1221
    %v1261 = vunpack.c.l.b16 %v1222
    %v1262 = vunpack.c.l.b16 %v1223
    %v1263 = vunpack.c.l.b16 %v1224
    %v1264 = vunpack.c.l.b16 %v1225
    %v1265 = vunpack.c.l.b16 %v1226
    %v1266 = vunpack.c.l.b16 %v1227
    %v1267 = vunpack.c.l.b16 %v1228
    %v1268 = vunpack.c.l.b16 %v1229
    %v1269 = vunpack.c.l.b16 %v1230
    %v1270 = vunpack.c.l.b16 %v1231
    %v1271 = vunpack.c.l.b16 %v1232
    %v1272 = vunpack.c.l.b16 %v1233
    %v1273 = vunpack.c.l.b16 %v1234
    %v1274 = vunpack.c.l.b16 %v1235
    %v1275 = vunpack.c.l.b16 %v1236
    %v1276 = vpack.c.b16 %v1261, %v1260
    %v1277 = vpack.c.b16 %v1263, %v1262
    %v1278 = vpack.c.b16 %v1265, %v1264
    %v1279 = vpack.c.b16 %v1267, %v1266
    %v1280 = vpack.c.b16 %v1269, %v1268
    %v1281 = vpack.c.b16 %v1271, %v1270
    %v1282 = vpack.c.b16 %v1273, %v1272
    %v1283 = vpack.c.b16 %v1275, %v1274
    %1292 = vmatprep.subr.bf16.mxu0 0
    %1293 = vmatpush1.bf16.msra.mxu0 %v1276
    %1294 = vmatprep.subr.bf16.mxu0 0
    %1295 = vmatpush1.bf16.msra.mxu0 %v1277
    %1296 = vmatprep.subr.bf16.mxu0 0
    %1297 = vmatpush1.bf16.msra.mxu0 %v1278
    %1298 = vmatprep.subr.bf16.mxu0 0
    %1299 = vmatpush1.bf16.msra.mxu0 %v1279
    %1300 = vmatprep.subr.bf16.mxu0 0
    %1301 = vmatpush1.bf16.msra.mxu0 %v1280
    %1302 = vmatprep.subr.bf16.mxu0 0
    %1303 = vmatpush1.bf16.msra.mxu0 %v1281
    %1304 = vmatprep.subr.bf16.mxu0 0
    %1305 = vmatpush1.bf16.msra.mxu0 %v1282
    %1306 = vmatprep.subr.bf16.mxu0 0
    %1307 = vmatpush1.bf16.msra.mxu0 %v1283
    %1308 = vmatprep.subr.bf16.mxu0 0
    %1309 = vmatpush1.bf16.msra.mxu0 0
    %1310 = vmatprep.subr.bf16.mxu0 0
    %1311 = vmatpush1.bf16.msra.mxu0 0
    %1312 = vmatprep.subr.bf16.mxu0 0
    %1313 = vmatpush1.bf16.msra.mxu0 0
    %1314 = vmatprep.subr.bf16.mxu0 0
    %1315 = vmatpush1.bf16.msra.mxu0 0
    %1316 = vmatprep.subr.bf16.mxu0 0
    %1317 = vmatpush1.bf16.msra.mxu0 0
    %1318 = vmatprep.subr.bf16.mxu0 0
    %1319 = vmatpush1.bf16.msra.mxu0 0
    %1320 = vmatprep.subr.bf16.mxu0 0
    %1321 = vmatpush1.bf16.msra.mxu0 0
    %1322 = vmatprep.subr.bf16.mxu0 0
    %1323 = vmatpush1.bf16.msra.mxu0 0
    %1324 = vmatprep.mubr.bf16.mxu0 0
    %1325 = vmatmul.mubr.bf16.gmra.mrb[0].mxu0 %v1220
    %v1326 = vpop.f32.mrb[0].mxu0
    %v1327 = vadd.f32 %v1242, %v1326
    %v1328 = vpop.f32.mrb[0].mxu0
    %v1329 = vpop.f32.mrb[0].mxu0
    %v1330 = vadd.f32 %v1242, %v1329
    %v1331 = vpop.f32.mrb[0].mxu0
    %1332 = vdwg.mxu0
    %v1333 = vld [vmem:[#allocation13] sm:$0x1]
    %v1335 = vlaneseq
    %v1336 = vshrl.u32 %v1335, 7
    %v1337 = vsub.s32 0, %v1336
    %v1338 = vrot.slane %v1333, %v1337
    %v1340 = vmul.f32 %v1327, %v1338
    %v1341 = vmul.f32 %v1330, %v1338
    %v1342 = vld [vmem:[#allocation14] sm:$0x1]
    %v1344 = vlaneseq
    %v1345 = vshrl.u32 %v1344, 7
    %v1346 = vsub.s32 0, %v1345
    %v1347 = vrot.slane %v1342, %v1346
    %v1349 = vadd.f32 %v1340, %v1347
    %v1350 = vadd.f32 %v1341, %v1347
    %v1351 = vmax.f32 %v1349, 0.0
    %v1352 = vmax.f32 %v1350, 0.0
    %v1353 = vpack.c.bf16 %v1059, %v1059
    %v1354 = vpack.c.bf16 %v1060, %v1060
    %v1355 = vpack.c.bf16 %v1351, %v1351
    %v1356 = vpack.c.bf16 %v1352, %v1352
    %v1358 = vsel %vm299, %v1353, 0
    %v1361 = vsel %vm1130, %v1355, 0
    %1363 = vmatprep.subr.bf16.mxu0 0
    %1364 = vmatpush1.bf16.msra.mxu0 %v1361
    %1365 = vmatprep.subr.bf16.mxu0 0
    %1366 = vmatpush1.bf16.msra.mxu0 0
    %1367 = vmatprep.subr.bf16.mxu0 0
    %1368 = vmatpush1.bf16.msra.mxu0 0
    %1369 = vmatprep.subr.bf16.mxu0 0
    %1370 = vmatpush1.bf16.msra.mxu0 0
    %1371 = vmatprep.subr.bf16.mxu0 0
    %1372 = vmatpush1.bf16.msra.mxu0 0
    %1373 = vmatprep.subr.bf16.mxu0 0
    %1374 = vmatpush1.bf16.msra.mxu0 0
    %1375 = vmatprep.subr.bf16.mxu0 0
    %1376 = vmatpush1.bf16.msra.mxu0 0
    %1377 = vmatprep.subr.bf16.mxu0 0
    %1378 = vmatpush1.bf16.msra.mxu0 0
    %1379 = vmatprep.subr.bf16.mxu0 0
    %1380 = vmatpush1.bf16.msra.mxu0 0
    %1381 = vmatprep.subr.bf16.mxu0 0
    %1382 = vmatpush1.bf16.msra.mxu0 0
    %1383 = vmatprep.subr.bf16.mxu0 0
    %1384 = vmatpush1.bf16.msra.mxu0 0
    %1385 = vmatprep.subr.bf16.mxu0 0
    %1386 = vmatpush1.bf16.msra.mxu0 0
    %1387 = vmatprep.subr.bf16.mxu0 0
    %1388 = vmatpush1.bf16.msra.mxu0 0
    %1389 = vmatprep.subr.bf16.mxu0 0
    %1390 = vmatpush1.bf16.msra.mxu0 0
    %1391 = vmatprep.subr.bf16.mxu0 0
    %1392 = vmatpush1.bf16.msra.mxu0 0
    %1393 = vmatprep.subr.bf16.mxu0 0
    %1394 = vmatpush1.bf16.msra.mxu0 0
    %1395 = vmatprep.mubr.bf16.mxu0 0
    %1396 = vmatmul.mubr.bf16.gmra.mrb[0].mxu0 %v1358
    %v1397 = vpop.f32.mrb[0].mxu0
    %v1398 = vadd.f32 0.0, %v1397
    %v1399 = vpop.f32.mrb[0].mxu0
    %v1400 = vpop.f32.mrb[0].mxu0
    %v1401 = vpop.f32.mrb[0].mxu0
    %1402 = vdwg.mxu0
    %v1404 = vsel %vm299, %v1354, 0
    %v1407 = vsel %vm1130, %v1356, 0
    %1409 = vmatprep.subr.bf16.mxu0 0
    %1410 = vmatpush1.bf16.msra.mxu0 %v1407
    %1411 = vmatprep.subr.bf16.mxu0 0
    %1412 = vmatpush1.bf16.msra.mxu0 0
    %1413 = vmatprep.subr.bf16.mxu0 0
    %1414 = vmatpush1.bf16.msra.mxu0 0
    %1415 = vmatprep.subr.bf16.mxu0 0
    %1416 = vmatpush1.bf16.msra.mxu0 0
    %1417 = vmatprep.subr.bf16.mxu0 0
    %1418 = vmatpush1.bf16.msra.mxu0 0
    %1419 = vmatprep.subr.bf16.mxu0 0
    %1420 = vmatpush1.bf16.msra.mxu0 0
    %1421 = vmatprep.subr.bf16.mxu0 0
    %1422 = vmatpush1.bf16.msra.mxu0 0
    %1423 = vmatprep.subr.bf16.mxu0 0
    %1424 = vmatpush1.bf16.msra.mxu0 0
    %1425 = vmatprep.subr.bf16.mxu0 0
    %1426 = vmatpush1.bf16.msra.mxu0 0
    %1427 = vmatprep.subr.bf16.mxu0 0
    %1428 = vmatpush1.bf16.msra.mxu0 0
    %1429 = vmatprep.subr.bf16.mxu0 0
    %1430 = vmatpush1.bf16.msra.mxu0 0
    %1431 = vmatprep.subr.bf16.mxu0 0
    %1432 = vmatpush1.bf16.msra.mxu0 0
    %1433 = vmatprep.subr.bf16.mxu0 0
    %1434 = vmatpush1.bf16.msra.mxu0 0
    %1435 = vmatprep.subr.bf16.mxu0 0
    %1436 = vmatpush1.bf16.msra.mxu0 0
    %1437 = vmatprep.subr.bf16.mxu0 0
    %1438 = vmatpush1.bf16.msra.mxu0 0
    %1439 = vmatprep.subr.bf16.mxu0 0
    %1440 = vmatpush1.bf16.msra.mxu0 0
    %1441 = vmatprep.mubr.bf16.mxu0 0
    %1442 = vmatmul.mubr.bf16.gmra.mrb[0].mxu0 %v1404
    %v1443 = vpop.f32.mrb[0].mxu0
    %v1444 = vadd.f32 0.0, %v1443
    %v1445 = vpop.f32.mrb[0].mxu0
    %v1446 = vpop.f32.mrb[0].mxu0
    %v1447 = vpop.f32.mrb[0].mxu0
    %1448 = vdwg.mxu0
    %v1449 = vpack.c.bf16 %v1444, %v1398
    %v1450 = vld [vmem:[#allocation16] sm:$0xf]
    %v1451 = vld [vmem:[#allocation16 + $0x4] sm:$0xf]
    %v1452 = vld [vmem:[#allocation16 + $0x8] sm:$0xf]
    %v1453 = vld [vmem:[#allocation16 + $0xc] sm:$0xf]
    %v1454 = vld [vmem:[#allocation16 + $0x10] sm:$0xf]
    %v1455 = vld [vmem:[#allocation16 + $0x14] sm:$0xf]
    %v1456 = vld [vmem:[#allocation16 + $0x18] sm:$0xf]
    %v1457 = vld [vmem:[#allocation16 + $0x1c] sm:$0xf]
    %v1458 = vld [vmem:[#allocation16 + $0x20] sm:$0xf]
    %v1459 = vld [vmem:[#allocation16 + $0x24] sm:$0xf]
    %v1460 = vld [vmem:[#allocation16 + $0x28] sm:$0xf]
    %v1461 = vld [vmem:[#allocation16 + $0x2c] sm:$0xf]
    %v1462 = vld [vmem:[#allocation16 + $0x30] sm:$0xf]
    %v1463 = vld [vmem:[#allocation16 + $0x34] sm:$0xf]
    %v1464 = vld [vmem:[#allocation16 + $0x38] sm:$0xf]
    %v1465 = vld [vmem:[#allocation16 + $0x3c] sm:$0xf]
    %v1466 = vld [vmem:[#allocation17] sm:$0x1]
    %v1468 = vlaneseq
    %v1469 = vshrl.u32 %v1468, 7
    %v1470 = vsub.s32 0, %v1469
    %v1471 = vrot.slane %v1466, %v1470
    %v1489 = vunpack.c.l.b16 %v1450
    %v1490 = vunpack.c.l.b16 %v1451
    %v1491 = vunpack.c.l.b16 %v1452
    %v1492 = vunpack.c.l.b16 %v1453
    %v1493 = vunpack.c.l.b16 %v1454
    %v1494 = vunpack.c.l.b16 %v1455
    %v1495 = vunpack.c.l.b16 %v1456
    %v1496 = vunpack.c.l.b16 %v1457
    %v1497 = vunpack.c.l.b16 %v1458
    %v1498 = vunpack.c.l.b16 %v1459
    %v1499 = vunpack.c.l.b16 %v1460
    %v1500 = vunpack.c.l.b16 %v1461
    %v1501 = vunpack.c.l.b16 %v1462
    %v1502 = vunpack.c.l.b16 %v1463
    %v1503 = vunpack.c.l.b16 %v1464
    %v1504 = vunpack.c.l.b16 %v1465
    %v1505 = vpack.c.b16 %v1490, %v1489
    %v1506 = vpack.c.b16 %v1492, %v1491
    %v1507 = vpack.c.b16 %v1494, %v1493
    %v1508 = vpack.c.b16 %v1496, %v1495
    %v1509 = vpack.c.b16 %v1498, %v1497
    %v1510 = vpack.c.b16 %v1500, %v1499
    %v1511 = vpack.c.b16 %v1502, %v1501
    %v1512 = vpack.c.b16 %v1504, %v1503
    %1521 = vmatprep.subr.bf16.mxu0 0
    %1522 = vmatpush1.bf16.msra.mxu0 %v1505
    %1523 = vmatprep.subr.bf16.mxu0 0
    %1524 = vmatpush1.bf16.msra.mxu0 %v1506
    %1525 = vmatprep.subr.bf16.mxu0 0
    %1526 = vmatpush1.bf16.msra.mxu0 %v1507
    %1527 = vmatprep.subr.bf16.mxu0 0
    %1528 = vmatpush1.bf16.msra.mxu0 %v1508
    %1529 = vmatprep.subr.bf16.mxu0 0
    %1530 = vmatpush1.bf16.msra.mxu0 %v1509
    %1531 = vmatprep.subr.bf16.mxu0 0
    %1532 = vmatpush1.bf16.msra.mxu0 %v1510
    %1533 = vmatprep.subr.bf16.mxu0 0
    %1534 = vmatpush1.bf16.msra.mxu0 %v1511
    %1535 = vmatprep.subr.bf16.mxu0 0
    %1536 = vmatpush1.bf16.msra.mxu0 %v1512
    %1537 = vmatprep.subr.bf16.mxu0 0
    %1538 = vmatpush1.bf16.msra.mxu0 0
    %1539 = vmatprep.subr.bf16.mxu0 0
    %1540 = vmatpush1.bf16.msra.mxu0 0
    %1541 = vmatprep.subr.bf16.mxu0 0
    %1542 = vmatpush1.bf16.msra.mxu0 0
    %1543 = vmatprep.subr.bf16.mxu0 0
    %1544 = vmatpush1.bf16.msra.mxu0 0
    %1545 = vmatprep.subr.bf16.mxu0 0
    %1546 = vmatpush1.bf16.msra.mxu0 0
    %1547 = vmatprep.subr.bf16.mxu0 0
    %1548 = vmatpush1.bf16.msra.mxu0 0
    %1549 = vmatprep.subr.bf16.mxu0 0
    %1550 = vmatpush1.bf16.msra.mxu0 0
    %1551 = vmatprep.subr.bf16.mxu0 0
    %1552 = vmatpush1.bf16.msra.mxu0 0
    %1553 = vmatprep.mubr.bf16.mxu0 0
    %1554 = vmatmul.mubr.bf16.gmra.mrb[0].mxu0 %v1449
    %v1555 = vpop.f32.mrb[0].mxu0
    %v1556 = vadd.f32 %v1471, %v1555
    %v1557 = vpop.f32.mrb[0].mxu0
    %v1558 = vpop.f32.mrb[0].mxu0
    %v1559 = vadd.f32 %v1471, %v1558
    %v1560 = vpop.f32.mrb[0].mxu0
    %1561 = vdwg.mxu0
    %v1562 = vld [vmem:[#allocation19] sm:$0x1]
    %v1564 = vlaneseq
    %v1565 = vshrl.u32 %v1564, 7
    %v1566 = vsub.s32 0, %v1565
    %v1567 = vrot.slane %v1562, %v1566
    %v1569 = vmul.f32 %v1556, %v1567
    %v1570 = vmul.f32 %v1559, %v1567
    %v1571 = vld [vmem:[#allocation20] sm:$0x1]
    %v1573 = vlaneseq
    %v1574 = vshrl.u32 %v1573, 7
    %v1575 = vsub.s32 0, %v1574
    %v1576 = vrot.slane %v1571, %v1575
    %v1578 = vadd.f32 %v1569, %v1576
    %v1579 = vadd.f32 %v1570, %v1576
    %v1580 = vmax.f32 %v1578, 0.0
    %v1581 = vmax.f32 %v1579, 0.0
    %v1582 = vadd.f32 %v1580, %v195
    %v1583 = vadd.f32 %v1581, %v196
    %1584 = vst [vmem:[#allocation22] sm:$0xff] %v1582
    %1585 = vst [vmem:[#allocation22 + $0x8] sm:$0xff] %v1583
    // Predicated region
    $region98: #{srfc_forward.1} parent=1 // pred_check
      _
    $region99: #{srfc_forward.1} parent=1 // pred_check_branch
      %1587 = sbr.rel (0) target = $region101
    $region100: #{srfc_forward.1} parent=1 // pred_region
      %s1589 = ssub.s32 256, 256
      %1590 = vsyncadd [#allocation4], %s1589
      %s1591 = sshll.u32 [#allocation22], 4
      %s1592 = int_to_ptr.vmem [resolvable:$true] %s1591
      %1597 = dma.vmem_to_hbm [thread:$0]  %s1592, 256, %s12, [#allocation4], 128, 128, 8
    $region101: #{srfc_forward.1} parent=1 // pred_fallthru
      _
    // Predicated region
    $region102: #{srfc_forward.1} parent=1 // pred_check
      _
    $region103: #{srfc_forward.1} parent=1 // pred_check_branch
      %1599 = sbr.rel (0) target = $region105
    $region104: #{srfc_forward.1} parent=1 // pred_region
      %s1601 = ssub.s32 768, 768
      %1602 = vsyncadd [#allocation24], %s1601
      %s1603 = sshll.u32 [#allocation23], 4
      %s1604 = int_to_ptr.vmem [resolvable:$true] %s1603
      %1609 = dma.vmem_to_hbm [thread:$0]  %s1604, 768, %s13, [#allocation24], 128, 128, 8
    $region105: #{srfc_forward.1} parent=1 // pred_fallthru
      _
    // Predicated region
    $region106: #{srfc_forward.1} parent=1 // pred_check
      _
    $region107: #{srfc_forward.1} parent=1 // pred_check_branch
      %1611 = sbr.rel (0) target = $region109
    $region108: #{srfc_forward.1} parent=1 // pred_region
      %1612 = dma.done [#allocation4], 256
    $region109: #{srfc_forward.1} parent=1 // pred_fallthru
      _
    // Predicated region
    $region110: #{srfc_forward.1} parent=1 // pred_check
      _
    $region111: #{srfc_forward.1} parent=1 // pred_check_branch
      %1614 = sbr.rel (0) target = $region113
    $region112: #{srfc_forward.1} parent=1 // pred_region
      %1615 = dma.done [#allocation24], 768
    $region113: #{srfc_forward.1} parent=1 // pred_fallthru
      _
    %1616 = vsyncpa [#allocation3], 1
    %1617 = vsyncpa [#allocation6], 1
    %1618 = vsyncpa [#allocation9], 1
    %1619 = vsyncpa [#allocation12], 1
    %1620 = vsyncpa [#allocation15], 1
    %1621 = vsyncpa [#allocation18], 1
    %1622 = vsyncpa [#allocation21], 1
    %1623 = vsyncpa [#allocation4], 1
    %1624 = vsyncpa [#allocation24], 1

</llo_original>
